<compile_context>
chip_gen: v7x
topology: tpu7x:2x2x1
jax: 0.10.0
libtpu: 0.0.40
codegen_flags: <defaults>
</compile_context>

<pallas_src>
import math

import numpy as np
import jax
import jax.numpy as jnp
from jax import lax
from jax.experimental import pallas as pl
from jax.experimental.pallas import tpu as pltpu

# ------------------------- synthetic module configuration --------------------
IN_CHANNELS = 32          # in_channels
NA, NB = 12, 20           # nodes of type "a" / type "b"
N = NA + NB
NUM_PATHS = 2             # len(aggr_paths)
RATIO = 0.5
MULTIPLIER = 1.0
K_SEL = math.ceil(RATIO * N)   # k = ceil(ratio * N)
NEG_INF = -1e30


def _erf(z):
    # Abramowitz & Stegun 7.1.26 (max abs err 1.5e-7) -> exact-erf gelu semantics
    # (torch F.gelu) with primitives guaranteed to lower in Mosaic (exp/abs/div).
    a1, a2, a3, a4, a5 = (0.254829592, -0.284496736, 1.421413741,
                          -1.453152027, 1.061405429)
    p_c = 0.3275911
    az = jnp.abs(z)
    t = 1.0 / (1.0 + p_c * az)
    poly = ((((a5 * t + a4) * t + a3) * t + a2) * t + a1) * t
    e = 1.0 - poly * jnp.exp(-az * az)
    return jnp.where(z >= 0.0, e, -e)


# -----------------------------------------------------------------------------
# Single fused kernel: per-path HGT scoring + fc across paths + SelectTopK tanh
# score + in-kernel rank-based top-k + one-hot gather of the pooled features.
# -----------------------------------------------------------------------------
def het_sag_fused_kernel(pp_ref, gp_ref, x_ref, w_ref, b_ref, tmask_ref, adj_ref,
                         xout_ref, score_ref, perm_ref):
    n, _ = x_ref.shape
    x = x_ref[...]                                            # (N, C) f32
    tmask = tmask_ref[...]                                    # (N, 1), 1.0 = type "a"
    is_a = tmask > 0.5
    not_a = 1.0 - tmask

    # One fused bf16 projection for both paths / both node types / q,k,v.
    proj = jnp.dot(x.astype(jnp.bfloat16), w_ref[...],
                   preferred_element_type=jnp.float32) + b_ref[...]   # (N, P*8)

    y = jnp.zeros((n, 1), jnp.float32)                        # fc accumulator
    for p in range(NUM_PATHS):                                # static unroll (P=2)
        off = 8 * p                                           # q_a q_b k_a k_b v_a v_b
        base = 16 * p                                         # per-path SMEM scalars
        q = jnp.where(is_a, proj[:, off + 0:off + 1], proj[:, off + 1:off + 2])
        k = jnp.where(is_a, proj[:, off + 2:off + 3], proj[:, off + 3:off + 4])
        v = jnp.where(is_a, proj[:, off + 4:off + 5], proj[:, off + 5:off + 6])
        # relation scales a_rel*p_rel / m_rel factor over (src_type, dst_type):
        # fold into per-node k / v once per destination type (SMEM scalar reads).
        k_da = k * jnp.where(is_a, pp_ref[base + 0], pp_ref[base + 2])  # dst "a"
        k_db = k * jnp.where(is_a, pp_ref[base + 1], pp_ref[base + 3])  # dst "b"
        v_da = v * jnp.where(is_a, pp_ref[base + 4], pp_ref[base + 6])
        v_db = v * jnp.where(is_a, pp_ref[base + 5], pp_ref[base + 7])
        # qk[j, i] = q_j * (dst j is "a" ? k_da_i : k_db_i) : one depth-2
        # dot_general instead of two depth-1 outer products.
        q2 = jnp.concatenate([q * tmask, q * not_a], axis=1)             # (N, 2)
        k2 = jnp.concatenate([k_da, k_db], axis=1)                       # (N, 2)
        qk = lax.dot_general(q2, k2, (((1,), (1,)), ((), ())),
                             preferred_element_type=jnp.float32)         # (N, N)
        adj = adj_ref[p]                                                 # (N, N) 0/1
        edge = adj > 0.0
        logits = jnp.where(edge, qk, NEG_INF)
        m = jnp.max(logits, axis=-1, keepdims=True)
        e = jnp.where(edge, jnp.exp(logits - m), 0.0)                    # masked exp
        denom = jnp.sum(e, axis=-1, keepdims=True)                       # (N, 1)
        # one (N,N)x(N,2) matmul, then select the column by destination type
        num2 = jnp.dot(e, jnp.concatenate([v_da, v_db], axis=1),
                       preferred_element_type=jnp.float32)               # (N, 2)
        num = jnp.where(is_a, num2[:, 0:1], num2[:, 1:2])
        safe_denom = jnp.where(denom > 0.0, denom, 1.0)
        agg = jnp.where(denom > 0.0, num / safe_denom, 0.0)              # softmax agg
        g = 0.5 * agg * (1.0 + _erf(agg * 0.7071067811865475))           # exact gelu
        attn_p = (g * jnp.where(is_a, pp_ref[base + 8], pp_ref[base + 9])
                  + jnp.where(is_a, pp_ref[base + 10], pp_ref[base + 11]))
        y = y + attn_p * gp_ref[p]                            # fc weight
    y = y + gp_ref[NUM_PATHS]                                 # fc bias
    # SelectTopK(1, nonlinearity="tanh"): s = tanh((y * w) / ||w||)
    s = jnp.tanh(y * gp_ref[NUM_PATHS + 1])                   # (N, 1)
    score_ref[...] = s

    # ---- in-kernel top-k via pairwise rank (tie-break: smaller index first) ---
    # s_i broadcast along lanes via a tiny dot-with-ones (avoids a (N,1)->(1,N)
    # relayout); s_j broadcast along lanes is a free VPU broadcast of s.
    ones_col = jnp.ones((n, 1), jnp.float32)
    s_i = lax.dot_general(ones_col, s, (((1,), (1,)), ((), ())),
                          preferred_element_type=jnp.float32)            # [j,i]=s_i
    idx_j = lax.broadcasted_iota(jnp.int32, (n, n), 0)
    idx_i = lax.broadcasted_iota(jnp.int32, (n, n), 1)
    gt = jnp.logical_or(s > s_i, jnp.logical_and(s == s_i, idx_j < idx_i))
    rank = jnp.sum(gt.astype(jnp.float32), axis=0,
                   keepdims=True).astype(jnp.int32)                      # (1, N)
    r_iota = lax.broadcasted_iota(jnp.int32, (K_SEL, n), 0)
    sel = (rank == r_iota).astype(jnp.float32)                           # (K, N)
    # pre-scale then gather: x[perm]*score[perm] == (x*score)[perm]
    xout_ref[...] = jnp.dot(sel, x * s,
                            preferred_element_type=jnp.float32) * MULTIPLIER
    node_iota = lax.broadcasted_iota(jnp.int32, (K_SEL, n), 1).astype(jnp.float32)
    perm_ref[...] = jnp.sum(sel * node_iota, axis=1,
                            keepdims=True).astype(jnp.int32)


# ----------------------------------- wrapper ----------------------------------
@jax.jit
def het_sag_pooling(x_all, w_packed, b_packed, type_mask, adj,
                    a_rel, p_rel, m_rel, aw_t, ab_t, fc_w, fc_b, sel_w):
    P = adj.shape[0]
    Nn, C = x_all.shape
    # --- fold module parameters into kernel-friendly layouts (tiny JAX glue) ---
    # per-path scalars -> SMEM: [sa(aa,ab,ba,bb), sm(aa,ab,ba,bb), aw(a,b), ab(a,b), pad]
    sa = (a_rel * p_rel).reshape(P, 4)
    sm = m_rel.reshape(P, 4)
    pp = jnp.concatenate(
        [sa, sm, aw_t, ab_t, jnp.zeros((P, 4), jnp.float32)], axis=1
    ).reshape(-1).astype(jnp.float32)                              # (P*16,)
    sel_scale = sel_w.reshape(-1) / jnp.sqrt(jnp.sum(sel_w ** 2))  # w / ||w|| (len 1)
    gp = jnp.concatenate([fc_w.reshape(-1), fc_b.reshape(-1),
                          sel_scale]).astype(jnp.float32)          # (P+2,)
    # both paths' per-type q/k/v linears packed into one (C, P*8) bf16 weight
    w_all = jnp.transpose(w_packed, (1, 0, 2)).reshape(C, P * 8).astype(jnp.bfloat16)
    b_all = jnp.transpose(b_packed, (1, 0, 2)).reshape(1, P * 8)

    # Grid-free single call: whole working set (~30 KB) lives in VMEM, per-path
    # loop is unrolled in-kernel, top-k + gather are fused in the same body.
    x_out, score, perm = pl.pallas_call(
        het_sag_fused_kernel,
        out_shape=(jax.ShapeDtypeStruct((K_SEL, C), jnp.float32),   # x_out
                   jax.ShapeDtypeStruct((Nn, 1), jnp.float32),      # score
                   jax.ShapeDtypeStruct((K_SEL, 1), jnp.int32)),    # perm
        in_specs=[
            pl.BlockSpec(memory_space=pltpu.MemorySpace.SMEM),   # pp (P*16,) f32
            pl.BlockSpec(memory_space=pltpu.MemorySpace.SMEM),   # gp (P+2,)  f32
            pl.BlockSpec(memory_space=pltpu.MemorySpace.VMEM),   # x  (N, C)  f32
            pl.BlockSpec(memory_space=pltpu.MemorySpace.VMEM),   # w  (C, P*8) bf16
            pl.BlockSpec(memory_space=pltpu.MemorySpace.VMEM),   # b  (1, P*8) f32
            pl.BlockSpec(memory_space=pltpu.MemorySpace.VMEM),   # tmask (N, 1)
            pl.BlockSpec(memory_space=pltpu.MemorySpace.VMEM),   # adj (P, N, N)
        ],
        out_specs=(pl.BlockSpec(memory_space=pltpu.MemorySpace.VMEM),
                   pl.BlockSpec(memory_space=pltpu.MemorySpace.VMEM),
                   pl.BlockSpec(memory_space=pltpu.MemorySpace.VMEM)),
    )(pp, gp, x_all, w_all, b_all, type_mask, adj)
    return x_out, score, perm[:, 0]


# --------------------- deterministic parameters / synthetic graph -------------
def build_inputs():
    # TODO(synk): torch_geometric's ragged heterogeneous node/edge dicts have no
    # Pallas equivalent; they are densified here (dense (N,C) node matrix ordered
    # [type "a"; type "b"] and per-path dense (P,N,N) dst x src adjacencies).
    keys = jax.random.split(jax.random.PRNGKey(0), 16)
    x_all = jax.random.normal(keys[0], (N, IN_CHANNELS), jnp.float32)

    # per-path, per-node-type q/k/v linears packed into (P, C, 8)
    w_packed = jnp.zeros((NUM_PATHS, IN_CHANNELS, 8), jnp.float32)
    w_packed = w_packed.at[:, :, :6].set(
        0.1 * jax.random.normal(keys[1], (NUM_PATHS, IN_CHANNELS, 6)))
    b_packed = jnp.zeros((NUM_PATHS, 1, 8), jnp.float32)
    b_packed = b_packed.at[:, :, :6].set(
        0.1 * jax.random.normal(keys[2], (NUM_PATHS, 1, 6)))

    type_of = jnp.concatenate([jnp.zeros((NA,), jnp.int32),
                               jnp.ones((NB,), jnp.int32)])
    type_mask = (type_of == 0).astype(jnp.float32)[:, None]           # (N, 1)

    # HGT relation params (heads=1, head_dim=1 -> scalar per (src_type, dst_type))
    a_rel = 1.0 + 0.5 * jax.random.normal(keys[3], (NUM_PATHS, 2, 2))
    p_rel = 1.0 + 0.5 * jax.random.normal(keys[4], (NUM_PATHS, 2, 2))
    m_rel = 1.0 + 0.5 * jax.random.normal(keys[5], (NUM_PATHS, 2, 2))

    # edge_index dicts -> dense 0/1 adjacency per aggregation path (dst x src)
    # path 0: [("a","to","b"), ("b","to","a")]; path 1: [("a","self","a"), ("b","self","b")]
    n_e = 48
    ek = jax.random.split(keys[6], 8)

    def rnd_edges(k1, k2, lo_s, hi_s, lo_d, hi_d):
        src = jax.random.randint(k1, (n_e,), lo_s, hi_s)
        dst = jax.random.randint(k2, (n_e,), lo_d, hi_d)
        return src, dst

    adj0 = jnp.zeros((N, N), jnp.float32)
    s, d = rnd_edges(ek[0], ek[1], 0, NA, NA, N)
    adj0 = adj0.at[d, s].set(1.0)
    s, d = rnd_edges(ek[2], ek[3], NA, N, 0, NA)
    adj0 = adj0.at[d, s].set(1.0)
    adj1 = jnp.zeros((N, N), jnp.float32)
    s, d = rnd_edges(ek[4], ek[5], 0, NA, 0, NA)
    adj1 = adj1.at[d, s].set(1.0)
    s, d = rnd_edges(ek[6], ek[7], NA, N, NA, N)
    adj1 = adj1.at[d, s].set(1.0)
    adj = jnp.stack([adj0, adj1])

    # per-path, per-dst-type a_lin (1 -> 1) scalars
    aw_t = 1.0 + 0.5 * jax.random.normal(keys[7], (NUM_PATHS, 2))
    ab_t = 0.1 * jax.random.normal(keys[8], (NUM_PATHS, 2))

    # fc = Linear(num_aggr_paths, 1): xavier-normal weight, zero bias
    fc_std = math.sqrt(2.0 / (NUM_PATHS + 1))
    fc_w = fc_std * jax.random.normal(keys[9], (1, NUM_PATHS), jnp.float32)
    fc_b = jnp.zeros((1, 1), jnp.float32)
    # SelectTopK attention weight (in_channels=1)
    sel_w = 0.5 + jax.random.uniform(keys[10], (1, 1), jnp.float32)

    return (x_all, w_packed, b_packed, type_mask, adj,
            a_rel, p_rel, m_rel, aw_t, ab_t, fc_w, fc_b, sel_w)


# --------------------------- plain-JAX reference ------------------------------
def reference_scores(x, w_packed, b_packed, type_mask, adj,
                     a_rel, p_rel, m_rel, aw_t, ab_t, fc_w, fc_b, sel_w):
    is_a = type_mask > 0.5
    type_of = jnp.where(type_mask[:, 0] > 0.5, 0, 1)
    src_t = jnp.broadcast_to(type_of[None, :], (N, N))    # [j,i] = type(src i)
    dst_t = jnp.broadcast_to(type_of[:, None], (N, N))    # [j,i] = type(dst j)
    cols = []
    for p in range(NUM_PATHS):
        proj = x @ w_packed[p] + b_packed[p]
        q = jnp.where(is_a, proj[:, 0:1], proj[:, 1:2])
        k = jnp.where(is_a, proj[:, 2:3], proj[:, 3:4])
        v = jnp.where(is_a, proj[:, 4:5], proj[:, 5:6])
        scale_a = (a_rel[p] * p_rel[p])[src_t, dst_t]
        scale_m = m_rel[p][src_t, dst_t]
        qk = q * k[:, 0][None, :]
        logits = jnp.where(adj[p] > 0.0, qk * scale_a, NEG_INF)
        m = jnp.max(logits, axis=-1, keepdims=True)
        e = jnp.exp(logits - m) * adj[p]
        denom = jnp.sum(e, axis=-1, keepdims=True)
        num = (e * scale_m) @ v
        agg = jnp.where(denom > 0.0, num / denom, 0.0)
        out = (jax.nn.gelu(agg, approximate=False)
               * aw_t[p][type_of][:, None] + ab_t[p][type_of][:, None])
        cols.append(out[:, 0])
    attn = jnp.stack(cols, axis=1)
    y = jnp.sum(attn * fc_w, axis=-1, keepdims=True) + fc_b
    norm = jnp.sqrt(jnp.sum(sel_w ** 2, axis=-1, keepdims=True))
    return jnp.tanh((y * sel_w) / norm)


if __name__ == "__main__":
    args = build_inputs()
    x_out, score, perm = het_sag_pooling(*args)
    jax.block_until_ready((x_out, score, perm))

    # sanity check against a plain-JAX reference of the same math
    score_ref = reference_scores(*args)
    x_all = args[0]
    perm_np = np.asarray(perm)
    x_out_ref = (np.asarray(x_all)[perm_np]
                 * np.asarray(score_ref)[perm_np] * MULTIPLIER)
    assert x_out.shape == (K_SEL, IN_CHANNELS)
    assert perm_np.shape == (K_SEL,)
    assert len(set(perm_np.tolist())) == K_SEL, "perm not unique"
    assert np.allclose(np.asarray(score), np.asarray(score_ref),
                       atol=1e-2, rtol=1e-2), "score mismatch"
    assert np.allclose(np.asarray(x_out), x_out_ref,
                       atol=1e-2, rtol=1e-2), "pooled feature mismatch"
    print("KERNEL_OK")
</pallas_src>

<mosaic_0001>
module attributes {stable_mosaic.version = 11 : i64} {
  func.func @het_sag_fused_kernel(%arg0: memref<32xf32, #tpu.memory_space<smem>>, %arg1: memref<4xf32, #tpu.memory_space<smem>>, %arg2: memref<32x32xf32, #tpu.memory_space<vmem>>, %arg3: memref<32x16xbf16, #tpu.memory_space<vmem>>, %arg4: memref<1x16xf32, #tpu.memory_space<vmem>>, %arg5: memref<32x1xf32, #tpu.memory_space<vmem>>, %arg6: memref<2x32x32xf32, #tpu.memory_space<vmem>>, %arg7: memref<16x32xf32, #tpu.memory_space<vmem>>, %arg8: memref<32x1xf32, #tpu.memory_space<vmem>>, %arg9: memref<16x1xi32, #tpu.memory_space<vmem>>) attributes {dimension_semantics = [], scalar_prefetch = 0 : i64, scratch_operands = 0 : i64, tpu.core_type = #tpu.core_type<tc>} {
    %c0 = arith.constant 0 : index
    %c0_0 = arith.constant 0 : index
    %0 = vector.load %arg2[%c0, %c0_0] : memref<32x32xf32, #tpu.memory_space<vmem>>, vector<32x32xf32>
    %c0_1 = arith.constant 0 : index
    %c0_2 = arith.constant 0 : index
    %1 = vector.load %arg5[%c0_1, %c0_2] : memref<32x1xf32, #tpu.memory_space<vmem>>, vector<32x1xf32>
    %cst = arith.constant 5.000000e-01 : f32
    %2 = vector.broadcast %cst : f32 to vector<32x1xf32>
    %3 = arith.cmpf ogt, %1, %2 : vector<32x1xf32>
    %cst_3 = arith.constant 1.000000e+00 : f32
    %4 = vector.broadcast %cst_3 : f32 to vector<32x1xf32>
    %5 = arith.subf %4, %1 : vector<32x1xf32>
    %6 = arith.truncf %0 : vector<32x32xf32> to vector<32x32xbf16>
    %c0_4 = arith.constant 0 : index
    %c0_5 = arith.constant 0 : index
    %7 = vector.load %arg3[%c0_4, %c0_5] : memref<32x16xbf16, #tpu.memory_space<vmem>>, vector<32x16xbf16>
    %cst_6 = arith.constant dense<0.000000e+00> : vector<32x16xf32>
    %8 = tpu.matmul %6, %7, %cst_6 {dimension_numbers = #tpu.dot_dimension_numbers<[1], [0], [0], [1], [0, 0, 1, 1], [], []>} : vector<32x32xbf16>, vector<32x16xbf16>, vector<32x16xf32> -> vector<32x16xf32>
    %c0_7 = arith.constant 0 : index
    %c0_8 = arith.constant 0 : index
    %9 = vector.load %arg4[%c0_7, %c0_8] : memref<1x16xf32, #tpu.memory_space<vmem>>, vector<1x16xf32>
    %10 = vector.broadcast %9 : vector<1x16xf32> to vector<32x16xf32>
    %11 = arith.addf %8, %10 : vector<32x16xf32>
    %cst_9 = arith.constant 0.000000e+00 : f32
    %12 = vector.broadcast %cst_9 : f32 to vector<32x1xf32>
    %13 = vector.extract_strided_slice %11 {offsets = [0, 0], sizes = [32, 1], strides = [1, 1]} : vector<32x16xf32> to vector<32x1xf32>
    %14 = vector.extract_strided_slice %11 {offsets = [0, 1], sizes = [32, 1], strides = [1, 1]} : vector<32x16xf32> to vector<32x1xf32>
    %15 = arith.select %3, %13, %14 : vector<32x1xi1>, vector<32x1xf32>
    %16 = vector.extract_strided_slice %11 {offsets = [0, 2], sizes = [32, 1], strides = [1, 1]} : vector<32x16xf32> to vector<32x1xf32>
    %17 = vector.extract_strided_slice %11 {offsets = [0, 3], sizes = [32, 1], strides = [1, 1]} : vector<32x16xf32> to vector<32x1xf32>
    %18 = arith.select %3, %16, %17 : vector<32x1xi1>, vector<32x1xf32>
    %19 = vector.extract_strided_slice %11 {offsets = [0, 4], sizes = [32, 1], strides = [1, 1]} : vector<32x16xf32> to vector<32x1xf32>
    %20 = vector.extract_strided_slice %11 {offsets = [0, 5], sizes = [32, 1], strides = [1, 1]} : vector<32x16xf32> to vector<32x1xf32>
    %21 = arith.select %3, %19, %20 : vector<32x1xi1>, vector<32x1xf32>
    %c0_10 = arith.constant 0 : index
    %22 = memref.load %arg0[%c0_10] : memref<32xf32, #tpu.memory_space<smem>>
    %c2 = arith.constant 2 : index
    %23 = memref.load %arg0[%c2] : memref<32xf32, #tpu.memory_space<smem>>
    %24 = vector.broadcast %22 : f32 to vector<32x1xf32>
    %25 = vector.broadcast %23 : f32 to vector<32x1xf32>
    %26 = arith.select %3, %24, %25 : vector<32x1xi1>, vector<32x1xf32>
    %27 = arith.mulf %18, %26 : vector<32x1xf32>
    %c1 = arith.constant 1 : index
    %28 = memref.load %arg0[%c1] : memref<32xf32, #tpu.memory_space<smem>>
    %c3 = arith.constant 3 : index
    %29 = memref.load %arg0[%c3] : memref<32xf32, #tpu.memory_space<smem>>
    %30 = vector.broadcast %28 : f32 to vector<32x1xf32>
    %31 = vector.broadcast %29 : f32 to vector<32x1xf32>
    %32 = arith.select %3, %30, %31 : vector<32x1xi1>, vector<32x1xf32>
    %33 = arith.mulf %18, %32 : vector<32x1xf32>
    %c4 = arith.constant 4 : index
    %34 = memref.load %arg0[%c4] : memref<32xf32, #tpu.memory_space<smem>>
    %c6 = arith.constant 6 : index
    %35 = memref.load %arg0[%c6] : memref<32xf32, #tpu.memory_space<smem>>
    %36 = vector.broadcast %34 : f32 to vector<32x1xf32>
    %37 = vector.broadcast %35 : f32 to vector<32x1xf32>
    %38 = arith.select %3, %36, %37 : vector<32x1xi1>, vector<32x1xf32>
    %39 = arith.mulf %21, %38 : vector<32x1xf32>
    %c5 = arith.constant 5 : index
    %40 = memref.load %arg0[%c5] : memref<32xf32, #tpu.memory_space<smem>>
    %c7 = arith.constant 7 : index
    %41 = memref.load %arg0[%c7] : memref<32xf32, #tpu.memory_space<smem>>
    %42 = vector.broadcast %40 : f32 to vector<32x1xf32>
    %43 = vector.broadcast %41 : f32 to vector<32x1xf32>
    %44 = arith.select %3, %42, %43 : vector<32x1xi1>, vector<32x1xf32>
    %45 = arith.mulf %21, %44 : vector<32x1xf32>
    %46 = arith.mulf %15, %1 : vector<32x1xf32>
    %47 = arith.mulf %15, %5 : vector<32x1xf32>
    %48 = tpu.concatenate %46, %47 in 1 : vector<32x1xf32>, vector<32x1xf32> -> vector<32x2xf32>
    %49 = tpu.concatenate %27, %33 in 1 : vector<32x1xf32>, vector<32x1xf32> -> vector<32x2xf32>
    %cst_11 = arith.constant dense<0.000000e+00> : vector<32x32xf32>
    %50 = tpu.matmul %48, %49, %cst_11 {dimension_numbers = #tpu.dot_dimension_numbers<[1], [1], [0], [0], [0, 0, 1, 0], [], []>} : vector<32x2xf32>, vector<32x2xf32>, vector<32x32xf32> -> vector<32x32xf32>
    %c0_12 = arith.constant 0 : index
    %c0_13 = arith.constant 0 : index
    %c0_14 = arith.constant 0 : index
    %51 = vector.load %arg6[%c0_12, %c0_13, %c0_14] : memref<2x32x32xf32, #tpu.memory_space<vmem>>, vector<1x32x32xf32>
    %52 = vector.shape_cast %51 : vector<1x32x32xf32> to vector<32x32xf32>
    %cst_15 = arith.constant 0.000000e+00 : f32
    %53 = vector.broadcast %cst_15 : f32 to vector<32x32xf32>
    %54 = arith.cmpf ogt, %52, %53 : vector<32x32xf32>
    %cst_16 = arith.constant -1.000000e+30 : f32
    %55 = vector.broadcast %cst_16 : f32 to vector<32x32xf32>
    %56 = arith.select %54, %50, %55 : vector<32x32xi1>, vector<32x32xf32>
    %cst_17 = arith.constant dense<0xFF800000> : vector<32xf32>
    %57 = vector.multi_reduction <maximumf>, %56, %cst_17 [1] : vector<32x32xf32> to vector<32xf32>
    %58 = vector.shape_cast %57 : vector<32xf32> to vector<32x1xf32>
    %59 = vector.broadcast %58 : vector<32x1xf32> to vector<32x32xf32>
    %60 = arith.subf %56, %59 : vector<32x32xf32>
    %61 = math.exp %60 : vector<32x32xf32>
    %cst_18 = arith.constant 0.000000e+00 : f32
    %62 = vector.broadcast %cst_18 : f32 to vector<32x32xf32>
    %63 = arith.select %54, %61, %62 : vector<32x32xi1>, vector<32x32xf32>
    %cst_19 = arith.constant dense<0.000000e+00> : vector<32xf32>
    %64 = vector.multi_reduction <add>, %63, %cst_19 [1] : vector<32x32xf32> to vector<32xf32>
    %65 = vector.shape_cast %64 : vector<32xf32> to vector<32x1xf32>
    %66 = tpu.concatenate %39, %45 in 1 : vector<32x1xf32>, vector<32x1xf32> -> vector<32x2xf32>
    %cst_20 = arith.constant dense<0.000000e+00> : vector<32x2xf32>
    %67 = tpu.matmul %63, %66, %cst_20 {dimension_numbers = #tpu.dot_dimension_numbers<[1], [0], [0], [1], [0, 0, 1, 1], [], []>} : vector<32x32xf32>, vector<32x2xf32>, vector<32x2xf32> -> vector<32x2xf32>
    %68 = vector.extract_strided_slice %67 {offsets = [0, 0], sizes = [32, 1], strides = [1, 1]} : vector<32x2xf32> to vector<32x1xf32>
    %69 = vector.extract_strided_slice %67 {offsets = [0, 1], sizes = [32, 1], strides = [1, 1]} : vector<32x2xf32> to vector<32x1xf32>
    %70 = arith.select %3, %68, %69 : vector<32x1xi1>, vector<32x1xf32>
    %cst_21 = arith.constant 0.000000e+00 : f32
    %71 = vector.broadcast %cst_21 : f32 to vector<32x1xf32>
    %72 = arith.cmpf ogt, %65, %71 : vector<32x1xf32>
    %cst_22 = arith.constant 1.000000e+00 : f32
    %73 = vector.broadcast %cst_22 : f32 to vector<32x1xf32>
    %74 = arith.select %72, %65, %73 : vector<32x1xi1>, vector<32x1xf32>
    %cst_23 = arith.constant 0.000000e+00 : f32
    %75 = vector.broadcast %cst_23 : f32 to vector<32x1xf32>
    %76 = arith.cmpf ogt, %65, %75 : vector<32x1xf32>
    %77 = arith.divf %70, %74 : vector<32x1xf32>
    %cst_24 = arith.constant 0.000000e+00 : f32
    %78 = vector.broadcast %cst_24 : f32 to vector<32x1xf32>
    %79 = arith.select %76, %77, %78 : vector<32x1xi1>, vector<32x1xf32>
    %cst_25 = arith.constant 5.000000e-01 : f32
    %80 = vector.broadcast %cst_25 : f32 to vector<32x1xf32>
    %81 = arith.mulf %80, %79 : vector<32x1xf32>
    %cst_26 = arith.constant 0.707106769 : f32
    %82 = vector.broadcast %cst_26 : f32 to vector<32x1xf32>
    %83 = arith.mulf %79, %82 : vector<32x1xf32>
    %84 = math.absf %83 : vector<32x1xf32>
    %cst_27 = arith.constant 0.327591091 : f32
    %85 = vector.broadcast %cst_27 : f32 to vector<32x1xf32>
    %86 = arith.mulf %85, %84 : vector<32x1xf32>
    %cst_28 = arith.constant 1.000000e+00 : f32
    %87 = vector.broadcast %cst_28 : f32 to vector<32x1xf32>
    %88 = arith.addf %87, %86 : vector<32x1xf32>
    %cst_29 = arith.constant 1.000000e+00 : f32
    %89 = vector.broadcast %cst_29 : f32 to vector<32x1xf32>
    %90 = arith.divf %89, %88 : vector<32x1xf32>
    %cst_30 = arith.constant 1.06140542 : f32
    %91 = vector.broadcast %cst_30 : f32 to vector<32x1xf32>
    %92 = arith.mulf %91, %90 : vector<32x1xf32>
    %cst_31 = arith.constant -1.45315206 : f32
    %93 = vector.broadcast %cst_31 : f32 to vector<32x1xf32>
    %94 = arith.addf %92, %93 : vector<32x1xf32>
    %95 = arith.mulf %94, %90 : vector<32x1xf32>
    %cst_32 = arith.constant 1.42141378 : f32
    %96 = vector.broadcast %cst_32 : f32 to vector<32x1xf32>
    %97 = arith.addf %95, %96 : vector<32x1xf32>
    %98 = arith.mulf %97, %90 : vector<32x1xf32>
    %cst_33 = arith.constant -0.284496725 : f32
    %99 = vector.broadcast %cst_33 : f32 to vector<32x1xf32>
    %100 = arith.addf %98, %99 : vector<32x1xf32>
    %101 = arith.mulf %100, %90 : vector<32x1xf32>
    %cst_34 = arith.constant 0.254829586 : f32
    %102 = vector.broadcast %cst_34 : f32 to vector<32x1xf32>
    %103 = arith.addf %101, %102 : vector<32x1xf32>
    %104 = arith.mulf %103, %90 : vector<32x1xf32>
    %cst_35 = arith.constant 0.000000e+00 : f32
    %105 = vector.broadcast %cst_35 : f32 to vector<32x1xf32>
    %106 = arith.subf %105, %84 : vector<32x1xf32>
    %107 = arith.mulf %106, %84 : vector<32x1xf32>
    %108 = math.exp %107 : vector<32x1xf32>
    %109 = arith.mulf %104, %108 : vector<32x1xf32>
    %cst_36 = arith.constant 1.000000e+00 : f32
    %110 = vector.broadcast %cst_36 : f32 to vector<32x1xf32>
    %111 = arith.subf %110, %109 : vector<32x1xf32>
    %cst_37 = arith.constant 0.000000e+00 : f32
    %112 = vector.broadcast %cst_37 : f32 to vector<32x1xf32>
    %113 = arith.cmpf oge, %83, %112 : vector<32x1xf32>
    %cst_38 = arith.constant 0.000000e+00 : f32
    %114 = vector.broadcast %cst_38 : f32 to vector<32x1xf32>
    %115 = arith.subf %114, %111 : vector<32x1xf32>
    %116 = arith.select %113, %111, %115 : vector<32x1xi1>, vector<32x1xf32>
    %cst_39 = arith.constant 1.000000e+00 : f32
    %117 = vector.broadcast %cst_39 : f32 to vector<32x1xf32>
    %118 = arith.addf %117, %116 : vector<32x1xf32>
    %119 = arith.mulf %81, %118 : vector<32x1xf32>
    %c8 = arith.constant 8 : index
    %120 = memref.load %arg0[%c8] : memref<32xf32, #tpu.memory_space<smem>>
    %c9 = arith.constant 9 : index
    %121 = memref.load %arg0[%c9] : memref<32xf32, #tpu.memory_space<smem>>
    %122 = vector.broadcast %120 : f32 to vector<32x1xf32>
    %123 = vector.broadcast %121 : f32 to vector<32x1xf32>
    %124 = arith.select %3, %122, %123 : vector<32x1xi1>, vector<32x1xf32>
    %125 = arith.mulf %119, %124 : vector<32x1xf32>
    %c10 = arith.constant 10 : index
    %126 = memref.load %arg0[%c10] : memref<32xf32, #tpu.memory_space<smem>>
    %c11 = arith.constant 11 : index
    %127 = memref.load %arg0[%c11] : memref<32xf32, #tpu.memory_space<smem>>
    %128 = vector.broadcast %126 : f32 to vector<32x1xf32>
    %129 = vector.broadcast %127 : f32 to vector<32x1xf32>
    %130 = arith.select %3, %128, %129 : vector<32x1xi1>, vector<32x1xf32>
    %131 = arith.addf %125, %130 : vector<32x1xf32>
    %c0_40 = arith.constant 0 : index
    %132 = memref.load %arg1[%c0_40] : memref<4xf32, #tpu.memory_space<smem>>
    %133 = vector.broadcast %132 : f32 to vector<32x1xf32>
    %134 = arith.mulf %131, %133 : vector<32x1xf32>
    %135 = arith.addf %12, %134 : vector<32x1xf32>
    %136 = vector.extract_strided_slice %11 {offsets = [0, 8], sizes = [32, 1], strides = [1, 1]} : vector<32x16xf32> to vector<32x1xf32>
    %137 = vector.extract_strided_slice %11 {offsets = [0, 9], sizes = [32, 1], strides = [1, 1]} : vector<32x16xf32> to vector<32x1xf32>
    %138 = arith.select %3, %136, %137 : vector<32x1xi1>, vector<32x1xf32>
    %139 = vector.extract_strided_slice %11 {offsets = [0, 10], sizes = [32, 1], strides = [1, 1]} : vector<32x16xf32> to vector<32x1xf32>
    %140 = vector.extract_strided_slice %11 {offsets = [0, 11], sizes = [32, 1], strides = [1, 1]} : vector<32x16xf32> to vector<32x1xf32>
    %141 = arith.select %3, %139, %140 : vector<32x1xi1>, vector<32x1xf32>
    %142 = vector.extract_strided_slice %11 {offsets = [0, 12], sizes = [32, 1], strides = [1, 1]} : vector<32x16xf32> to vector<32x1xf32>
    %143 = vector.extract_strided_slice %11 {offsets = [0, 13], sizes = [32, 1], strides = [1, 1]} : vector<32x16xf32> to vector<32x1xf32>
    %144 = arith.select %3, %142, %143 : vector<32x1xi1>, vector<32x1xf32>
    %c16 = arith.constant 16 : index
    %145 = memref.load %arg0[%c16] : memref<32xf32, #tpu.memory_space<smem>>
    %c18 = arith.constant 18 : index
    %146 = memref.load %arg0[%c18] : memref<32xf32, #tpu.memory_space<smem>>
    %147 = vector.broadcast %145 : f32 to vector<32x1xf32>
    %148 = vector.broadcast %146 : f32 to vector<32x1xf32>
    %149 = arith.select %3, %147, %148 : vector<32x1xi1>, vector<32x1xf32>
    %150 = arith.mulf %141, %149 : vector<32x1xf32>
    %c17 = arith.constant 17 : index
    %151 = memref.load %arg0[%c17] : memref<32xf32, #tpu.memory_space<smem>>
    %c19 = arith.constant 19 : index
    %152 = memref.load %arg0[%c19] : memref<32xf32, #tpu.memory_space<smem>>
    %153 = vector.broadcast %151 : f32 to vector<32x1xf32>
    %154 = vector.broadcast %152 : f32 to vector<32x1xf32>
    %155 = arith.select %3, %153, %154 : vector<32x1xi1>, vector<32x1xf32>
    %156 = arith.mulf %141, %155 : vector<32x1xf32>
    %c20 = arith.constant 20 : index
    %157 = memref.load %arg0[%c20] : memref<32xf32, #tpu.memory_space<smem>>
    %c22 = arith.constant 22 : index
    %158 = memref.load %arg0[%c22] : memref<32xf32, #tpu.memory_space<smem>>
    %159 = vector.broadcast %157 : f32 to vector<32x1xf32>
    %160 = vector.broadcast %158 : f32 to vector<32x1xf32>
    %161 = arith.select %3, %159, %160 : vector<32x1xi1>, vector<32x1xf32>
    %162 = arith.mulf %144, %161 : vector<32x1xf32>
    %c21 = arith.constant 21 : index
    %163 = memref.load %arg0[%c21] : memref<32xf32, #tpu.memory_space<smem>>
    %c23 = arith.constant 23 : index
    %164 = memref.load %arg0[%c23] : memref<32xf32, #tpu.memory_space<smem>>
    %165 = vector.broadcast %163 : f32 to vector<32x1xf32>
    %166 = vector.broadcast %164 : f32 to vector<32x1xf32>
    %167 = arith.select %3, %165, %166 : vector<32x1xi1>, vector<32x1xf32>
    %168 = arith.mulf %144, %167 : vector<32x1xf32>
    %169 = arith.mulf %138, %1 : vector<32x1xf32>
    %170 = arith.mulf %138, %5 : vector<32x1xf32>
    %171 = tpu.concatenate %169, %170 in 1 : vector<32x1xf32>, vector<32x1xf32> -> vector<32x2xf32>
    %172 = tpu.concatenate %150, %156 in 1 : vector<32x1xf32>, vector<32x1xf32> -> vector<32x2xf32>
    %cst_41 = arith.constant dense<0.000000e+00> : vector<32x32xf32>
    %173 = tpu.matmul %171, %172, %cst_41 {dimension_numbers = #tpu.dot_dimension_numbers<[1], [1], [0], [0], [0, 0, 1, 0], [], []>} : vector<32x2xf32>, vector<32x2xf32>, vector<32x32xf32> -> vector<32x32xf32>
    %c1_42 = arith.constant 1 : index
    %c0_43 = arith.constant 0 : index
    %c0_44 = arith.constant 0 : index
    %174 = vector.load %arg6[%c1_42, %c0_43, %c0_44] : memref<2x32x32xf32, #tpu.memory_space<vmem>>, vector<1x32x32xf32>
    %175 = vector.shape_cast %174 : vector<1x32x32xf32> to vector<32x32xf32>
    %cst_45 = arith.constant 0.000000e+00 : f32
    %176 = vector.broadcast %cst_45 : f32 to vector<32x32xf32>
    %177 = arith.cmpf ogt, %175, %176 : vector<32x32xf32>
    %cst_46 = arith.constant -1.000000e+30 : f32
    %178 = vector.broadcast %cst_46 : f32 to vector<32x32xf32>
    %179 = arith.select %177, %173, %178 : vector<32x32xi1>, vector<32x32xf32>
    %cst_47 = arith.constant dense<0xFF800000> : vector<32xf32>
    %180 = vector.multi_reduction <maximumf>, %179, %cst_47 [1] : vector<32x32xf32> to vector<32xf32>
    %181 = vector.shape_cast %180 : vector<32xf32> to vector<32x1xf32>
    %182 = vector.broadcast %181 : vector<32x1xf32> to vector<32x32xf32>
    %183 = arith.subf %179, %182 : vector<32x32xf32>
    %184 = math.exp %183 : vector<32x32xf32>
    %cst_48 = arith.constant 0.000000e+00 : f32
    %185 = vector.broadcast %cst_48 : f32 to vector<32x32xf32>
    %186 = arith.select %177, %184, %185 : vector<32x32xi1>, vector<32x32xf32>
    %cst_49 = arith.constant dense<0.000000e+00> : vector<32xf32>
    %187 = vector.multi_reduction <add>, %186, %cst_49 [1] : vector<32x32xf32> to vector<32xf32>
    %188 = vector.shape_cast %187 : vector<32xf32> to vector<32x1xf32>
    %189 = tpu.concatenate %162, %168 in 1 : vector<32x1xf32>, vector<32x1xf32> -> vector<32x2xf32>
    %cst_50 = arith.constant dense<0.000000e+00> : vector<32x2xf32>
    %190 = tpu.matmul %186, %189, %cst_50 {dimension_numbers = #tpu.dot_dimension_numbers<[1], [0], [0], [1], [0, 0, 1, 1], [], []>} : vector<32x32xf32>, vector<32x2xf32>, vector<32x2xf32> -> vector<32x2xf32>
    %191 = vector.extract_strided_slice %190 {offsets = [0, 0], sizes = [32, 1], strides = [1, 1]} : vector<32x2xf32> to vector<32x1xf32>
    %192 = vector.extract_strided_slice %190 {offsets = [0, 1], sizes = [32, 1], strides = [1, 1]} : vector<32x2xf32> to vector<32x1xf32>
    %193 = arith.select %3, %191, %192 : vector<32x1xi1>, vector<32x1xf32>
    %cst_51 = arith.constant 0.000000e+00 : f32
    %194 = vector.broadcast %cst_51 : f32 to vector<32x1xf32>
    %195 = arith.cmpf ogt, %188, %194 : vector<32x1xf32>
    %cst_52 = arith.constant 1.000000e+00 : f32
    %196 = vector.broadcast %cst_52 : f32 to vector<32x1xf32>
    %197 = arith.select %195, %188, %196 : vector<32x1xi1>, vector<32x1xf32>
    %cst_53 = arith.constant 0.000000e+00 : f32
    %198 = vector.broadcast %cst_53 : f32 to vector<32x1xf32>
    %199 = arith.cmpf ogt, %188, %198 : vector<32x1xf32>
    %200 = arith.divf %193, %197 : vector<32x1xf32>
    %cst_54 = arith.constant 0.000000e+00 : f32
    %201 = vector.broadcast %cst_54 : f32 to vector<32x1xf32>
    %202 = arith.select %199, %200, %201 : vector<32x1xi1>, vector<32x1xf32>
    %cst_55 = arith.constant 5.000000e-01 : f32
    %203 = vector.broadcast %cst_55 : f32 to vector<32x1xf32>
    %204 = arith.mulf %203, %202 : vector<32x1xf32>
    %cst_56 = arith.constant 0.707106769 : f32
    %205 = vector.broadcast %cst_56 : f32 to vector<32x1xf32>
    %206 = arith.mulf %202, %205 : vector<32x1xf32>
    %207 = math.absf %206 : vector<32x1xf32>
    %cst_57 = arith.constant 0.327591091 : f32
    %208 = vector.broadcast %cst_57 : f32 to vector<32x1xf32>
    %209 = arith.mulf %208, %207 : vector<32x1xf32>
    %cst_58 = arith.constant 1.000000e+00 : f32
    %210 = vector.broadcast %cst_58 : f32 to vector<32x1xf32>
    %211 = arith.addf %210, %209 : vector<32x1xf32>
    %cst_59 = arith.constant 1.000000e+00 : f32
    %212 = vector.broadcast %cst_59 : f32 to vector<32x1xf32>
    %213 = arith.divf %212, %211 : vector<32x1xf32>
    %cst_60 = arith.constant 1.06140542 : f32
    %214 = vector.broadcast %cst_60 : f32 to vector<32x1xf32>
    %215 = arith.mulf %214, %213 : vector<32x1xf32>
    %cst_61 = arith.constant -1.45315206 : f32
    %216 = vector.broadcast %cst_61 : f32 to vector<32x1xf32>
    %217 = arith.addf %215, %216 : vector<32x1xf32>
    %218 = arith.mulf %217, %213 : vector<32x1xf32>
    %cst_62 = arith.constant 1.42141378 : f32
    %219 = vector.broadcast %cst_62 : f32 to vector<32x1xf32>
    %220 = arith.addf %218, %219 : vector<32x1xf32>
    %221 = arith.mulf %220, %213 : vector<32x1xf32>
    %cst_63 = arith.constant -0.284496725 : f32
    %222 = vector.broadcast %cst_63 : f32 to vector<32x1xf32>
    %223 = arith.addf %221, %222 : vector<32x1xf32>
    %224 = arith.mulf %223, %213 : vector<32x1xf32>
    %cst_64 = arith.constant 0.254829586 : f32
    %225 = vector.broadcast %cst_64 : f32 to vector<32x1xf32>
    %226 = arith.addf %224, %225 : vector<32x1xf32>
    %227 = arith.mulf %226, %213 : vector<32x1xf32>
    %cst_65 = arith.constant 0.000000e+00 : f32
    %228 = vector.broadcast %cst_65 : f32 to vector<32x1xf32>
    %229 = arith.subf %228, %207 : vector<32x1xf32>
    %230 = arith.mulf %229, %207 : vector<32x1xf32>
    %231 = math.exp %230 : vector<32x1xf32>
    %232 = arith.mulf %227, %231 : vector<32x1xf32>
    %cst_66 = arith.constant 1.000000e+00 : f32
    %233 = vector.broadcast %cst_66 : f32 to vector<32x1xf32>
    %234 = arith.subf %233, %232 : vector<32x1xf32>
    %cst_67 = arith.constant 0.000000e+00 : f32
    %235 = vector.broadcast %cst_67 : f32 to vector<32x1xf32>
    %236 = arith.cmpf oge, %206, %235 : vector<32x1xf32>
    %cst_68 = arith.constant 0.000000e+00 : f32
    %237 = vector.broadcast %cst_68 : f32 to vector<32x1xf32>
    %238 = arith.subf %237, %234 : vector<32x1xf32>
    %239 = arith.select %236, %234, %238 : vector<32x1xi1>, vector<32x1xf32>
    %cst_69 = arith.constant 1.000000e+00 : f32
    %240 = vector.broadcast %cst_69 : f32 to vector<32x1xf32>
    %241 = arith.addf %240, %239 : vector<32x1xf32>
    %242 = arith.mulf %204, %241 : vector<32x1xf32>
    %c24 = arith.constant 24 : index
    %243 = memref.load %arg0[%c24] : memref<32xf32, #tpu.memory_space<smem>>
    %c25 = arith.constant 25 : index
    %244 = memref.load %arg0[%c25] : memref<32xf32, #tpu.memory_space<smem>>
    %245 = vector.broadcast %243 : f32 to vector<32x1xf32>
    %246 = vector.broadcast %244 : f32 to vector<32x1xf32>
    %247 = arith.select %3, %245, %246 : vector<32x1xi1>, vector<32x1xf32>
    %248 = arith.mulf %242, %247 : vector<32x1xf32>
    %c26 = arith.constant 26 : index
    %249 = memref.load %arg0[%c26] : memref<32xf32, #tpu.memory_space<smem>>
    %c27 = arith.constant 27 : index
    %250 = memref.load %arg0[%c27] : memref<32xf32, #tpu.memory_space<smem>>
    %251 = vector.broadcast %249 : f32 to vector<32x1xf32>
    %252 = vector.broadcast %250 : f32 to vector<32x1xf32>
    %253 = arith.select %3, %251, %252 : vector<32x1xi1>, vector<32x1xf32>
    %254 = arith.addf %248, %253 : vector<32x1xf32>
    %c1_70 = arith.constant 1 : index
    %255 = memref.load %arg1[%c1_70] : memref<4xf32, #tpu.memory_space<smem>>
    %256 = vector.broadcast %255 : f32 to vector<32x1xf32>
    %257 = arith.mulf %254, %256 : vector<32x1xf32>
    %258 = arith.addf %135, %257 : vector<32x1xf32>
    %c2_71 = arith.constant 2 : index
    %259 = memref.load %arg1[%c2_71] : memref<4xf32, #tpu.memory_space<smem>>
    %260 = vector.broadcast %259 : f32 to vector<32x1xf32>
    %261 = arith.addf %258, %260 : vector<32x1xf32>
    %c3_72 = arith.constant 3 : index
    %262 = memref.load %arg1[%c3_72] : memref<4xf32, #tpu.memory_space<smem>>
    %263 = vector.broadcast %262 : f32 to vector<32x1xf32>
    %264 = arith.mulf %261, %263 : vector<32x1xf32>
    %265 = math.tanh %264 : vector<32x1xf32>
    %c0_73 = arith.constant 0 : index
    %c0_74 = arith.constant 0 : index
    %266 = vector.load %arg8[%c0_73, %c0_74] : memref<32x1xf32, #tpu.memory_space<vmem>>, vector<32x1xf32>
    tpu.vector_store %arg8[%c0_73, %c0_74], %265 {strides = array<i32>} : memref<32x1xf32, #tpu.memory_space<vmem>>, vector<32x1xf32>,
    %cst_75 = arith.constant 1.000000e+00 : f32
    %267 = vector.broadcast %cst_75 : f32 to vector<32x1xf32>
    %cst_76 = arith.constant dense<0.000000e+00> : vector<32x32xf32>
    %268 = tpu.matmul %267, %265, %cst_76 {dimension_numbers = #tpu.dot_dimension_numbers<[1], [1], [0], [0], [0, 0, 1, 0], [], []>} : vector<32x1xf32>, vector<32x1xf32>, vector<32x32xf32> -> vector<32x32xf32>
    %269 = tpu.iota {dimensions = array<i32: 0>} : vector<32x32xi32>
    %270 = tpu.iota {dimensions = array<i32: 1>} : vector<32x32xi32>
    %271 = vector.broadcast %265 : vector<32x1xf32> to vector<32x32xf32>
    %272 = arith.cmpf ogt, %271, %268 : vector<32x32xf32>
    %273 = vector.broadcast %265 : vector<32x1xf32> to vector<32x32xf32>
    %274 = arith.cmpf oeq, %273, %268 : vector<32x32xf32>
    %275 = arith.cmpi slt, %269, %270 : vector<32x32xi32>
    %276 = arith.andi %274, %275 : vector<32x32xi1>
    %277 = arith.ori %272, %276 : vector<32x32xi1>
    %278 = arith.extui %277 : vector<32x32xi1> to vector<32x32xi32>
    %279 = arith.sitofp %278 : vector<32x32xi32> to vector<32x32xf32>
    %cst_77 = arith.constant dense<0.000000e+00> : vector<32xf32>
    %280 = vector.multi_reduction <add>, %279, %cst_77 [0] : vector<32x32xf32> to vector<32xf32>
    %281 = vector.shape_cast %280 : vector<32xf32> to vector<1x32xf32>
    %282 = arith.fptosi %281 : vector<1x32xf32> to vector<1x32xi32>
    %283 = tpu.iota {dimensions = array<i32: 0>} : vector<16x32xi32>
    %284 = vector.broadcast %282 : vector<1x32xi32> to vector<16x32xi32>
    %285 = arith.cmpi eq, %284, %283 : vector<16x32xi32>
    %286 = arith.extui %285 : vector<16x32xi1> to vector<16x32xi32>
    %287 = arith.sitofp %286 : vector<16x32xi32> to vector<16x32xf32>
    %288 = vector.broadcast %265 : vector<32x1xf32> to vector<32x32xf32>
    %289 = arith.mulf %0, %288 : vector<32x32xf32>
    %cst_78 = arith.constant dense<0.000000e+00> : vector<16x32xf32>
    %290 = tpu.matmul %287, %289, %cst_78 {dimension_numbers = #tpu.dot_dimension_numbers<[1], [0], [0], [1], [0, 0, 1, 1], [], []>} : vector<16x32xf32>, vector<32x32xf32>, vector<16x32xf32> -> vector<16x32xf32>
    %cst_79 = arith.constant 1.000000e+00 : f32
    %291 = vector.broadcast %cst_79 : f32 to vector<16x32xf32>
    %292 = arith.mulf %290, %291 : vector<16x32xf32>
    %c0_80 = arith.constant 0 : index
    %c0_81 = arith.constant 0 : index
    %293 = vector.load %arg7[%c0_80, %c0_81] : memref<16x32xf32, #tpu.memory_space<vmem>>, vector<16x32xf32>
    tpu.vector_store %arg7[%c0_80, %c0_81], %292 {strides = array<i32>} : memref<16x32xf32, #tpu.memory_space<vmem>>, vector<16x32xf32>,
    %294 = tpu.iota {dimensions = array<i32: 1>} : vector<16x32xi32>
    %295 = arith.sitofp %294 : vector<16x32xi32> to vector<16x32xf32>
    %296 = arith.mulf %287, %295 : vector<16x32xf32>
    %cst_82 = arith.constant dense<0.000000e+00> : vector<16xf32>
    %297 = vector.multi_reduction <add>, %296, %cst_82 [1] : vector<16x32xf32> to vector<16xf32>
    %298 = vector.shape_cast %297 : vector<16xf32> to vector<16x1xf32>
    %299 = arith.fptosi %298 : vector<16x1xf32> to vector<16x1xi32>
    %c0_83 = arith.constant 0 : index
    %c0_84 = arith.constant 0 : index
    %300 = vector.load %arg9[%c0_83, %c0_84] : memref<16x1xi32, #tpu.memory_space<vmem>>, vector<16x1xi32>
    tpu.vector_store %arg9[%c0_83, %c0_84], %299 {strides = array<i32>} : memref<16x1xi32, #tpu.memory_space<vmem>>, vector<16x1xi32>,
    return
  }
}

</mosaic_0001>

<llo_original>
// kernel: mul.1
$region0: #{mul.1}
  #allocation0 [shape = 's32[1]{0}', space=sflag, size = 0x4, scoped, tag = 'scoped memory for mul.1']
  %s0 = inlined_call_operand.vmem [shape: f32[2,2,2], index: 0, kind: input, shape index: {}]
  %s1 = inlined_call_operand.vmem [shape: f32[2,2,2], index: 1, kind: input, shape index: {}]
  %s2 = inlined_call_operand.vmem [shape: f32[2,2,2], index: 2, kind: output, shape index: {}]
  %v3 = vld [vmem:[%s0] sm:$0x3]
  %v4 = vld [vmem:[%s1] sm:$0x3]
  %5 = xla_tuple %v3, %v4
  %6 = xla_tuple %5
  %v7 = vmul.f32 %v3, %v4
  %8 = xla_tuple %v7
  %9 = vst [vmem:[%s2] sm:$0x3] %v7
  %s10 = scalar_lea.vmem %s0, 2
  %v11 = vld [vmem:[%s10] sm:$0x3]
  %s12 = scalar_lea.vmem %s1, 2
  %v13 = vld [vmem:[%s12] sm:$0x3]
  %14 = xla_tuple %v11, %v13
  %15 = xla_tuple %14
  %v16 = vmul.f32 %v11, %v13
  %17 = xla_tuple %v16
  %s18 = scalar_lea.vmem %s2, 2
  %19 = vst [vmem:[%s18] sm:$0x3] %v16

// kernel: het_sag_pooling.1
$region0: #{het_sag_pooling.1}
  #allocation0 [shape = 'u32[]', space=smem, size = 0x4, offset = 0x4, fixed_abs, tag = 'smem constant byte address 0x4 - core index']
  #allocation1 [shape = 'u32[144,128]{1,0:T(1,128)}', space=vmem, size = 0x12000, scoped, tag = 'internal scratch']
  %s0 = inlined_call_operand.vmem [shape: f32[32], index: 0, kind: input, shape index: {}]
  %s1 = inlined_call_operand.vmem [shape: f32[4], index: 1, kind: input, shape index: {}]
  %s2 = inlined_call_operand.vmem [shape: f32[32,32], index: 2, kind: input, shape index: {}]
  %s3 = inlined_call_operand.vmem [shape: bf16[32,16], index: 3, kind: input, shape index: {}]
  %s4 = inlined_call_operand.vmem [shape: f32[1,16], index: 4, kind: input, shape index: {}]
  %s5 = inlined_call_operand.vmem [shape: f32[32,1], index: 5, kind: input, shape index: {}]
  %s6 = inlined_call_operand.vmem [shape: f32[2,32,32], index: 6, kind: input, shape index: {}]
  %s7 = inlined_call_operand.hbm [shape: f32[16,32], index: 7, kind: output, shape index: {0}]
  %s8 = inlined_call_operand.vmem [shape: f32[32,1], index: 8, kind: output, shape index: {1}]
  %s9 = inlined_call_operand.vmem [shape: s32[16,1], index: 9, kind: output, shape index: {2}]
  %10 = xla_tuple %s7, %s8, %s9
  %s11 = sld [smem:[#allocation0]]
  $region62: #{het_sag_pooling.1} parent=0
    _
  %s13 = ssub.s32 1, %s11
  %s14 = scalar_select 0, %s13, %s11
  $region1: #{het_sag_pooling.1} parent=0
    #allocation2 [shape = 'u8[512]{0}', space=smem, size = 0x200, scoped, tag = 'input window, operand 0, single buffered']
    #allocation3 [shape = 's32[1]{0}', space=sflag, size = 0x4, scoped, tag = 'scoped memory for het_sag_pooling.1']
    #allocation4 [shape = 's32[1]{0}', space=sflag, size = 0x4, scoped, tag = 'scoped memory for het_sag_pooling.1']
    #allocation5 [shape = 'u8[512]{0}', space=smem, size = 0x200, scoped, tag = 'input window, operand 1, single buffered']
    #allocation6 [shape = 's32[1]{0}', space=sflag, size = 0x4, scoped, tag = 'scoped memory for het_sag_pooling.1']
    #allocation7 [shape = 'u8[8192]{0}', space=vmem, size = 0x2000, scoped, tag = 'output window, operand 0, single buffered']
    %15 = vsyncpa [#allocation4], 0
    %16 = vsyncpa [#allocation6], 0
    %17 = vsyncpa [#allocation3], 0
    // Predicated region
    $region2: #{het_sag_pooling.1} parent=1 // pred_check
      _
    $region3: #{het_sag_pooling.1} parent=1 // pred_check_branch
      %19 = sbr.rel (0) target = $region5
    $region4: #{het_sag_pooling.1} parent=1 // pred_region
      %s21 = ssub.s32 16, 16
      %22 = vsyncadd [#allocation4], %s21
      %s24 = sshll.u32 %s0, 4
      %s25 = int_to_ptr.vmem [resolvable:$true] %s24
      %27 = dma.vmem_to_smem %s25, 16, [#allocation2], [#allocation4]
    $region5: #{het_sag_pooling.1} parent=1 // pred_fallthru
      _
    // Predicated region
    $region6: #{het_sag_pooling.1} parent=1 // pred_check
      _
    $region7: #{het_sag_pooling.1} parent=1 // pred_check_branch
      %29 = sbr.rel (0) target = $region9
    $region8: #{het_sag_pooling.1} parent=1 // pred_region
      %s31 = ssub.s32 16, 16
      %32 = vsyncadd [#allocation6], %s31
      %s34 = sshll.u32 %s1, 4
      %s35 = int_to_ptr.vmem [resolvable:$true] %s34
      %37 = dma.vmem_to_smem %s35, 16, [#allocation5], [#allocation6]
    $region9: #{het_sag_pooling.1} parent=1 // pred_fallthru
      _
    // Predicated region
    $region10: #{het_sag_pooling.1} parent=1 // pred_check
      _
    $region11: #{het_sag_pooling.1} parent=1 // pred_check_branch
      %39 = sbr.rel (0) target = $region13
    $region12: #{het_sag_pooling.1} parent=1 // pred_region
      _
    $region13: #{het_sag_pooling.1} parent=1 // pred_fallthru
      _
    // Predicated region
    $region14: #{het_sag_pooling.1} parent=1 // pred_check
      _
    $region15: #{het_sag_pooling.1} parent=1 // pred_check_branch
      %41 = sbr.rel (0) target = $region17
    $region16: #{het_sag_pooling.1} parent=1 // pred_region
      _
    $region17: #{het_sag_pooling.1} parent=1 // pred_fallthru
      _
    // Predicated region
    $region18: #{het_sag_pooling.1} parent=1 // pred_check
      _
    $region19: #{het_sag_pooling.1} parent=1 // pred_check_branch
      %43 = sbr.rel (0) target = $region21
    $region20: #{het_sag_pooling.1} parent=1 // pred_region
      _
    $region21: #{het_sag_pooling.1} parent=1 // pred_fallthru
      _
    // Predicated region
    $region22: #{het_sag_pooling.1} parent=1 // pred_check
      _
    $region23: #{het_sag_pooling.1} parent=1 // pred_check_branch
      %45 = sbr.rel (0) target = $region25
    $region24: #{het_sag_pooling.1} parent=1 // pred_region
      _
    $region25: #{het_sag_pooling.1} parent=1 // pred_fallthru
      _
    // Predicated region
    $region26: #{het_sag_pooling.1} parent=1 // pred_check
      _
    $region27: #{het_sag_pooling.1} parent=1 // pred_check_branch
      %47 = sbr.rel (0) target = $region29
    $region28: #{het_sag_pooling.1} parent=1 // pred_region
      _
    $region29: #{het_sag_pooling.1} parent=1 // pred_fallthru
      _
    // Predicated region
    $region30: #{het_sag_pooling.1} parent=1 // pred_check
      _
    $region31: #{het_sag_pooling.1} parent=1 // pred_check_branch
      %49 = sbr.rel (0) target = $region33
    $region32: #{het_sag_pooling.1} parent=1 // pred_region
      %50 = dma.done [#allocation4], 16
    $region33: #{het_sag_pooling.1} parent=1 // pred_fallthru
      _
    // Predicated region
    $region34: #{het_sag_pooling.1} parent=1 // pred_check
      _
    $region35: #{het_sag_pooling.1} parent=1 // pred_check_branch
      %52 = sbr.rel (0) target = $region37
    $region36: #{het_sag_pooling.1} parent=1 // pred_region
      %53 = dma.done [#allocation6], 16
    $region37: #{het_sag_pooling.1} parent=1 // pred_fallthru
      _
    %54 = sfence
    %v56 = vld [vmem:[%s2] sm:$0xff]
    %v57 = vld [vmem:[%s2 + $0x8] sm:$0xff]
    %v58 = vld [vmem:[%s2 + $0x10] sm:$0xff]
    %v59 = vld [vmem:[%s2 + $0x18] sm:$0xff]
    %v60 = vld [vmem:[%s5] sm:$0xff]
    %v61 = vld [vmem:[%s5 + $0x8] sm:$0xff]
    %v62 = vld [vmem:[%s5 + $0x10] sm:$0xff]
    %v63 = vld [vmem:[%s5 + $0x18] sm:$0xff]
    %vm64 = vcmp.gt.f32.partialorder %v60, 0.5
    %vm65 = vcmp.gt.f32.partialorder %v61, 0.5
    %vm66 = vcmp.gt.f32.partialorder %v62, 0.5
    %vm67 = vcmp.gt.f32.partialorder %v63, 0.5
    %v68 = vsub.f32 1.0, %v60
    %v69 = vsub.f32 1.0, %v61
    %v70 = vsub.f32 1.0, %v62
    %v71 = vsub.f32 1.0, %v63
    %v72 = vpack.c.bf16 %v57, %v56
    %v73 = vpack.c.bf16 %v59, %v58
    %v74 = vld [vmem:[%s3] sm:$0xf]
    %v75 = vld [vmem:[%s3 + $0x4] sm:$0xf]
    %v76 = vld [vmem:[%s3 + $0x8] sm:$0xf]
    %v77 = vld [vmem:[%s3 + $0xc] sm:$0xf]
    %v78 = vld [vmem:[%s4] sm:$0x1]
    %v80 = vlaneseq
    %v81 = vshrl.u32 %v80, 7
    %v82 = vsub.s32 0, %v81
    %v83 = vrot.slane %v78, %v82
    %v89 = vunpack.c.l.b16 %v74
    %v90 = vunpack.c.l.b16 %v75
    %v91 = vunpack.c.l.b16 %v76
    %v92 = vunpack.c.l.b16 %v77
    %v93 = vpack.c.b16 %v90, %v89
    %v94 = vpack.c.b16 %v92, %v91
    %vm97 = vcmask 261120
    %v99 = vsel %vm97, %v72, 0
    %v102 = vsel %vm97, %v73, 0
    %104 = vmatprep.subr.bf16.mxu0 0
    %105 = vmatpush1.bf16.msra.mxu0 %v93
    %106 = vmatprep.subr.bf16.mxu0 0
    %107 = vmatpush1.bf16.msra.mxu0 %v94
    %108 = vmatprep.subr.bf16.mxu0 0
    %109 = vmatpush1.bf16.msra.mxu0 0
    %110 = vmatprep.subr.bf16.mxu0 0
    %111 = vmatpush1.bf16.msra.mxu0 0
    %112 = vmatprep.subr.bf16.mxu0 0
    %113 = vmatpush1.bf16.msra.mxu0 0
    %114 = vmatprep.subr.bf16.mxu0 0
    %115 = vmatpush1.bf16.msra.mxu0 0
    %116 = vmatprep.subr.bf16.mxu0 0
    %117 = vmatpush1.bf16.msra.mxu0 0
    %118 = vmatprep.subr.bf16.mxu0 0
    %119 = vmatpush1.bf16.msra.mxu0 0
    %120 = vmatprep.subr.bf16.mxu0 0
    %121 = vmatpush1.bf16.msra.mxu0 0
    %122 = vmatprep.subr.bf16.mxu0 0
    %123 = vmatpush1.bf16.msra.mxu0 0
    %124 = vmatprep.subr.bf16.mxu0 0
    %125 = vmatpush1.bf16.msra.mxu0 0
    %126 = vmatprep.subr.bf16.mxu0 0
    %127 = vmatpush1.bf16.msra.mxu0 0
    %128 = vmatprep.subr.bf16.mxu0 0
    %129 = vmatpush1.bf16.msra.mxu0 0
    %130 = vmatprep.subr.bf16.mxu0 0
    %131 = vmatpush1.bf16.msra.mxu0 0
    %132 = vmatprep.subr.bf16.mxu0 0
    %133 = vmatpush1.bf16.msra.mxu0 0
    %134 = vmatprep.subr.bf16.mxu0 0
    %135 = vmatpush1.bf16.msra.mxu0 0
    %136 = vmatprep.mubr.bf16.mxu0 0
    %137 = vmatmul.mubr.bf16.gmra.mrb[0].mxu0 %v99
    %v138 = vpop.f32.mrb[0].mxu0
    %v139 = vadd.f32 %v83, %v138
    %v140 = vpop.f32.mrb[0].mxu0
    %v141 = vpop.f32.mrb[0].mxu0
    %v142 = vadd.f32 %v83, %v141
    %v143 = vpop.f32.mrb[0].mxu0
    %144 = vmatprep.mubr.bf16.mxu0 0
    %145 = vmatmul.mubr.bf16.gmra.mrb[0].mxu0 %v102
    %v146 = vpop.f32.mrb[0].mxu0
    %v147 = vadd.f32 %v83, %v146
    %v148 = vpop.f32.mrb[0].mxu0
    %v149 = vpop.f32.mrb[0].mxu0
    %v150 = vadd.f32 %v83, %v149
    %v151 = vpop.f32.mrb[0].mxu0
    %152 = vdwg.mxu0
    %157 = vrot.lane.b32.xlu0 %v139, 127
    %v158 = vpop.permute.xlu0 %157
    %159 = vrot.lane.b32.xlu0 %v142, 127
    %v160 = vpop.permute.xlu0 %159
    %161 = vrot.lane.b32.xlu0 %v147, 127
    %v162 = vpop.permute.xlu0 %161
    %163 = vrot.lane.b32.xlu0 %v150, 127
    %v164 = vpop.permute.xlu0 %163
    %v169 = vsel %vm64, %v139, %v158
    %v170 = vsel %vm65, %v142, %v160
    %v171 = vsel %vm66, %v147, %v162
    %v172 = vsel %vm67, %v150, %v164
    %173 = vrot.lane.b32.xlu0 %v139, 126
    %v174 = vpop.permute.xlu0 %173
    %175 = vrot.lane.b32.xlu0 %v142, 126
    %v176 = vpop.permute.xlu0 %175
    %177 = vrot.lane.b32.xlu0 %v147, 126
    %v178 = vpop.permute.xlu0 %177
    %179 = vrot.lane.b32.xlu0 %v150, 126
    %v180 = vpop.permute.xlu0 %179
    %185 = vrot.lane.b32.xlu0 %v139, 125
    %v186 = vpop.permute.xlu0 %185
    %187 = vrot.lane.b32.xlu0 %v142, 125
    %v188 = vpop.permute.xlu0 %187
    %189 = vrot.lane.b32.xlu0 %v147, 125
    %v190 = vpop.permute.xlu0 %189
    %191 = vrot.lane.b32.xlu0 %v150, 125
    %v192 = vpop.permute.xlu0 %191
    %v197 = vsel %vm64, %v174, %v186
    %v198 = vsel %vm65, %v176, %v188
    %v199 = vsel %vm66, %v178, %v190
    %v200 = vsel %vm67, %v180, %v192
    %201 = vrot.lane.b32.xlu0 %v139, 124
    %v202 = vpop.permute.xlu0 %201
    %203 = vrot.lane.b32.xlu0 %v142, 124
    %v204 = vpop.permute.xlu0 %203
    %205 = vrot.lane.b32.xlu0 %v147, 124
    %v206 = vpop.permute.xlu0 %205
    %207 = vrot.lane.b32.xlu0 %v150, 124
    %v208 = vpop.permute.xlu0 %207
    %213 = vrot.lane.b32.xlu0 %v139, 123
    %v214 = vpop.permute.xlu0 %213
    %215 = vrot.lane.b32.xlu0 %v142, 123
    %v216 = vpop.permute.xlu0 %215
    %217 = vrot.lane.b32.xlu0 %v147, 123
    %v218 = vpop.permute.xlu0 %217
    %219 = vrot.lane.b32.xlu0 %v150, 123
    %v220 = vpop.permute.xlu0 %219
    %v225 = vsel %vm64, %v202, %v214
    %v226 = vsel %vm65, %v204, %v216
    %v227 = vsel %vm66, %v206, %v218
    %v228 = vsel %vm67, %v208, %v220
    %s229 = sld [smem:[#allocation2]]
    %s230 = sld [smem:[#allocation2 + $0x2]]
    %v231 = vstv %s229
    %v232 = vstv %s230
    %v233 = vsel %vm64, %v231, %v232
    %v234 = vsel %vm65, %v231, %v232
    %v235 = vsel %vm66, %v231, %v232
    %v236 = vsel %vm67, %v231, %v232
    %v237 = vmul.f32 %v197, %v233
    %v238 = vmul.f32 %v198, %v234
    %v239 = vmul.f32 %v199, %v235
    %v240 = vmul.f32 %v200, %v236
    %s241 = sld [smem:[#allocation2 + $0x1]]
    %s242 = sld [smem:[#allocation2 + $0x3]]
    %v243 = vstv %s241
    %v244 = vstv %s242
    %v245 = vsel %vm64, %v243, %v244
    %v246 = vsel %vm65, %v243, %v244
    %v247 = vsel %vm66, %v243, %v244
    %v248 = vsel %vm67, %v243, %v244
    %v249 = vmul.f32 %v197, %v245
    %v250 = vmul.f32 %v198, %v246
    %v251 = vmul.f32 %v199, %v247
    %v252 = vmul.f32 %v200, %v248
    %s253 = sld [smem:[#allocation2 + $0x4]]
    %s254 = sld [smem:[#allocation2 + $0x6]]
    %v255 = vstv %s253
    %v256 = vstv %s254
    %v257 = vsel %vm64, %v255, %v256
    %v258 = vsel %vm65, %v255, %v256
    %v259 = vsel %vm66, %v255, %v256
    %v260 = vsel %vm67, %v255, %v256
    %v261 = vmul.f32 %v225, %v257
    %v262 = vmul.f32 %v226, %v258
    %v263 = vmul.f32 %v227, %v259
    %v264 = vmul.f32 %v228, %v260
    %s265 = sld [smem:[#allocation2 + $0x5]]
    %s266 = sld [smem:[#allocation2 + $0x7]]
    %v267 = vstv %s265
    %v268 = vstv %s266
    %v269 = vsel %vm64, %v267, %v268
    %v270 = vsel %vm65, %v267, %v268
    %v271 = vsel %vm66, %v267, %v268
    %v272 = vsel %vm67, %v267, %v268
    %v273 = vmul.f32 %v225, %v269
    %v274 = vmul.f32 %v226, %v270
    %v275 = vmul.f32 %v227, %v271
    %v276 = vmul.f32 %v228, %v272
    %v277 = vmul.f32 %v169, %v60
    %v278 = vmul.f32 %v170, %v61
    %v279 = vmul.f32 %v171, %v62
    %v280 = vmul.f32 %v172, %v63
    %v281 = vmul.f32 %v169, %v68
    %v282 = vmul.f32 %v170, %v69
    %v283 = vmul.f32 %v171, %v70
    %v284 = vmul.f32 %v172, %v71
    %289 = vrot.lane.b32.xlu0 %v281, 1
    %v290 = vpop.permute.xlu0 %289
    %291 = vrot.lane.b32.xlu0 %v282, 1
    %v292 = vpop.permute.xlu0 %291
    %293 = vrot.lane.b32.xlu0 %v283, 1
    %v294 = vpop.permute.xlu0 %293
    %295 = vrot.lane.b32.xlu0 %v284, 1
    %v296 = vpop.permute.xlu0 %295
    %vm301 = vcmask 7168
    %v302 = vsel %vm301, %v277, %v290
    %v303 = vsel %vm301, %v278, %v292
    %v304 = vsel %vm301, %v279, %v294
    %v305 = vsel %vm301, %v280, %v296
    %310 = vrot.lane.b32.xlu0 %v249, 1
    %v311 = vpop.permute.xlu0 %310
    %312 = vrot.lane.b32.xlu0 %v250, 1
    %v313 = vpop.permute.xlu0 %312
    %314 = vrot.lane.b32.xlu0 %v251, 1
    %v315 = vpop.permute.xlu0 %314
    %316 = vrot.lane.b32.xlu0 %v252, 1
    %v317 = vpop.permute.xlu0 %316
    %v322 = vsel %vm301, %v237, %v311
    %v323 = vsel %vm301, %v238, %v313
    %v324 = vsel %vm301, %v239, %v315
    %v325 = vsel %vm301, %v240, %v317
    %vm326 = vcmask 15360
    %v328 = vsel %vm326, %v302, 0
    %v331 = vsel %vm326, %v303, 0
    %v334 = vsel %vm326, %v304, 0
    %v337 = vsel %vm326, %v305, 0
    %v340 = vsel %vm326, %v322, 0
    %v343 = vsel %vm326, %v323, 0
    %v346 = vsel %vm326, %v324, 0
    %v349 = vsel %vm326, %v325, 0
    %351 = vmatprep.subr.mxu0 0.0
    %352 = vmatpush1.xpose.msra.mxu0 %v340
    %353 = vmatprep.subr.mxu0 0.0
    %354 = vmatpush1.xpose.msra.mxu0 %v343
    %355 = vmatprep.subr.mxu0 0.0
    %356 = vmatpush1.xpose.msra.mxu0 %v346
    %357 = vmatprep.subr.mxu0 0.0
    %358 = vmatpush1.xpose.msra.mxu0 %v349
    %359 = vmatprep.subr.mxu0 0.0
    %360 = vmatpush1.xpose.msra.mxu0 0.0
    %361 = vmatprep.subr.mxu0 0.0
    %362 = vmatpush1.xpose.msra.mxu0 0.0
    %363 = vmatprep.subr.mxu0 0.0
    %364 = vmatpush1.xpose.msra.mxu0 0.0
    %365 = vmatprep.subr.mxu0 0.0
    %366 = vmatpush1.xpose.msra.mxu0 0.0
    %367 = vmatprep.subr.mxu0 0.0
    %368 = vmatpush1.xpose.msra.mxu0 0.0
    %369 = vmatprep.subr.mxu0 0.0
    %370 = vmatpush1.xpose.msra.mxu0 0.0
    %371 = vmatprep.subr.mxu0 0.0
    %372 = vmatpush1.xpose.msra.mxu0 0.0
    %373 = vmatprep.subr.mxu0 0.0
    %374 = vmatpush1.xpose.msra.mxu0 0.0
    %375 = vmatprep.subr.mxu0 0.0
    %376 = vmatpush1.xpose.msra.mxu0 0.0
    %377 = vmatprep.subr.mxu0 0.0
    %378 = vmatpush1.xpose.msra.mxu0 0.0
    %379 = vmatprep.subr.mxu0 0.0
    %380 = vmatpush1.xpose.msra.mxu0 0.0
    %381 = vmatprep.subr.mxu0 0.0
    %382 = vmatpush1.xpose.msra.mxu0 0.0
    %383 = vmatprep.subr.mxu0 0.0
    %384 = vmatpush1.xpose.msra.mxu0 0.0
    %385 = vmatprep.subr.mxu0 0.0
    %386 = vmatpush1.xpose.msra.mxu0 0.0
    %387 = vmatprep.subr.mxu0 0.0
    %388 = vmatpush1.xpose.msra.mxu0 0.0
    %389 = vmatprep.subr.mxu0 0.0
    %390 = vmatpush1.xpose.msra.mxu0 0.0
    %391 = vmatprep.subr.mxu0 0.0
    %392 = vmatpush1.xpose.msra.mxu0 0.0
    %393 = vmatprep.subr.mxu0 0.0
    %394 = vmatpush1.xpose.msra.mxu0 0.0
    %395 = vmatprep.subr.mxu0 0.0
    %396 = vmatpush1.xpose.msra.mxu0 0.0
    %397 = vmatprep.subr.mxu0 0.0
    %398 = vmatpush1.xpose.msra.mxu0 0.0
    %399 = vmatprep.subr.mxu0 0.0
    %400 = vmatpush1.xpose.msra.mxu0 0.0
    %401 = vmatprep.subr.mxu0 0.0
    %402 = vmatpush1.xpose.msra.mxu0 0.0
    %403 = vmatprep.subr.mxu0 0.0
    %404 = vmatpush1.xpose.msra.mxu0 0.0
    %405 = vmatprep.subr.mxu0 0.0
    %406 = vmatpush1.xpose.msra.mxu0 0.0
    %407 = vmatprep.subr.mxu0 0.0
    %408 = vmatpush1.xpose.msra.mxu0 0.0
    %409 = vmatprep.subr.mxu0 0.0
    %410 = vmatpush1.xpose.msra.mxu0 0.0
    %411 = vmatprep.subr.mxu0 0.0
    %412 = vmatpush1.xpose.msra.mxu0 0.0
    %413 = vmatprep.subr.mxu0 0.0
    %414 = vmatpush1.xpose.msra.mxu0 0.0
    %415 = vmatprep.mubr.f32.mxu0 0.0
    %416 = vmatmul.mubr.f32.gmra.mrb[0].mxu0 %v328
    %v417 = vpop.f32.mrb[0].mxu0
    %v418 = vadd.f32 0.0, %v417
    %v419 = vpop.f32.mrb[0].mxu0
    %420 = vmatprep.mubr.f32.mxu0 0.0
    %421 = vmatmul.mubr.f32.gmra.mrb[0].mxu0 %v331
    %v422 = vpop.f32.mrb[0].mxu0
    %v423 = vadd.f32 0.0, %v422
    %v424 = vpop.f32.mrb[0].mxu0
    %425 = vmatprep.mubr.f32.mxu0 0.0
    %426 = vmatmul.mubr.f32.gmra.mrb[0].mxu0 %v334
    %v427 = vpop.f32.mrb[0].mxu0
    %v428 = vadd.f32 0.0, %v427
    %v429 = vpop.f32.mrb[0].mxu0
    %430 = vmatprep.mubr.f32.mxu0 0.0
    %431 = vmatmul.mubr.f32.gmra.mrb[0].mxu0 %v337
    %v432 = vpop.f32.mrb[0].mxu0
    %v433 = vadd.f32 0.0, %v432
    %v434 = vpop.f32.mrb[0].mxu0
    %435 = vdwg.mxu0
    %v436 = vld [vmem:[%s6] sm:$0xff]
    %v437 = vld [vmem:[%s6 + $0x8] sm:$0xff]
    %v438 = vld [vmem:[%s6 + $0x10] sm:$0xff]
    %v439 = vld [vmem:[%s6 + $0x18] sm:$0xff]
    %vm440 = vcmp.gt.f32.partialorder %v436, 0.0
    %vm441 = vcmp.gt.f32.partialorder %v437, 0.0
    %vm442 = vcmp.gt.f32.partialorder %v438, 0.0
    %vm443 = vcmp.gt.f32.partialorder %v439, 0.0
    %v444 = vsel %vm440, %v418, -1e+30
    %v445 = vsel %vm441, %v423, -1e+30
    %v446 = vsel %vm442, %v428, -1e+30
    %v447 = vsel %vm443, %v433, -1e+30
    %v448 = vsel %vm97, %v444, -inf
    %449 = vmax.xlane.f32.xlu0 %v448
    %v450 = vpop.xlane.xlu0 %449
    %v451 = vsel %vm97, %v445, -inf
    %452 = vmax.xlane.f32.xlu0 %v451
    %v453 = vpop.xlane.xlu0 %452
    %v454 = vsel %vm97, %v446, -inf
    %455 = vmax.xlane.f32.xlu0 %v454
    %v456 = vpop.xlane.xlu0 %455
    %v457 = vsel %vm97, %v447, -inf
    %458 = vmax.xlane.f32.xlu0 %v457
    %v459 = vpop.xlane.xlu0 %458
    %v460 = vsub.f32 %v444, %v450
    %v461 = vsub.f32 %v445, %v453
    %v462 = vsub.f32 %v446, %v456
    %v463 = vsub.f32 %v447, %v459
    %v464 = vmul.f32 %v460, 1.442695
    %v465 = vpow.pop %v464
    %v466 = vmul.f32 %v461, 1.442695
    %v467 = vpow.pop %v466
    %v468 = vmul.f32 %v462, 1.442695
    %v469 = vpow.pop %v468
    %v470 = vmul.f32 %v463, 1.442695
    %v471 = vpow.pop %v470
    %v472 = vsel %vm440, %v465, 0.0
    %v473 = vsel %vm441, %v467, 0.0
    %v474 = vsel %vm442, %v469, 0.0
    %v475 = vsel %vm443, %v471, 0.0
    %v476 = vsel %vm97, %v472, 0.0
    %477 = vadd.xlane.f32.xlu0 %v476
    %v478 = vpop.xlane.xlu0 %477
    %v479 = vsel %vm97, %v473, 0.0
    %480 = vadd.xlane.f32.xlu0 %v479
    %v481 = vpop.xlane.xlu0 %480
    %v482 = vsel %vm97, %v474, 0.0
    %483 = vadd.xlane.f32.xlu0 %v482
    %v484 = vpop.xlane.xlu0 %483
    %v485 = vsel %vm97, %v475, 0.0
    %486 = vadd.xlane.f32.xlu0 %v485
    %v487 = vpop.xlane.xlu0 %486
    %492 = vrot.lane.b32.xlu0 %v273, 1
    %v493 = vpop.permute.xlu0 %492
    %494 = vrot.lane.b32.xlu0 %v274, 1
    %v495 = vpop.permute.xlu0 %494
    %496 = vrot.lane.b32.xlu0 %v275, 1
    %v497 = vpop.permute.xlu0 %496
    %498 = vrot.lane.b32.xlu0 %v276, 1
    %v499 = vpop.permute.xlu0 %498
    %v504 = vsel %vm301, %v261, %v493
    %v505 = vsel %vm301, %v262, %v495
    %v506 = vsel %vm301, %v263, %v497
    %v507 = vsel %vm301, %v264, %v499
    %v509 = vsel %vm97, %v472, 0
    %v512 = vsel %vm97, %v473, 0
    %v515 = vsel %vm97, %v474, 0
    %v518 = vsel %vm97, %v475, 0
    %520 = vmatprep.subr.mxu0 0.0
    %521 = vmatpush1.msra.mxu0 %v504
    %522 = vmatprep.subr.mxu0 0.0
    %523 = vmatpush1.msra.mxu0 %v505
    %524 = vmatprep.subr.mxu0 0.0
    %525 = vmatpush1.msra.mxu0 %v506
    %526 = vmatprep.subr.mxu0 0.0
    %527 = vmatpush1.msra.mxu0 %v507
    %528 = vmatprep.subr.mxu0 0.0
    %529 = vmatpush1.msra.mxu0 0.0
    %530 = vmatprep.subr.mxu0 0.0
    %531 = vmatpush1.msra.mxu0 0.0
    %532 = vmatprep.subr.mxu0 0.0
    %533 = vmatpush1.msra.mxu0 0.0
    %534 = vmatprep.subr.mxu0 0.0
    %535 = vmatpush1.msra.mxu0 0.0
    %536 = vmatprep.subr.mxu0 0.0
    %537 = vmatpush1.msra.mxu0 0.0
    %538 = vmatprep.subr.mxu0 0.0
    %539 = vmatpush1.msra.mxu0 0.0
    %540 = vmatprep.subr.mxu0 0.0
    %541 = vmatpush1.msra.mxu0 0.0
    %542 = vmatprep.subr.mxu0 0.0
    %543 = vmatpush1.msra.mxu0 0.0
    %544 = vmatprep.subr.mxu0 0.0
    %545 = vmatpush1.msra.mxu0 0.0
    %546 = vmatprep.subr.mxu0 0.0
    %547 = vmatpush1.msra.mxu0 0.0
    %548 = vmatprep.subr.mxu0 0.0
    %549 = vmatpush1.msra.mxu0 0.0
    %550 = vmatprep.subr.mxu0 0.0
    %551 = vmatpush1.msra.mxu0 0.0
    %552 = vmatprep.subr.mxu0 0.0
    %553 = vmatpush1.msra.mxu0 0.0
    %554 = vmatprep.subr.mxu0 0.0
    %555 = vmatpush1.msra.mxu0 0.0
    %556 = vmatprep.subr.mxu0 0.0
    %557 = vmatpush1.msra.mxu0 0.0
    %558 = vmatprep.subr.mxu0 0.0
    %559 = vmatpush1.msra.mxu0 0.0
    %560 = vmatprep.subr.mxu0 0.0
    %561 = vmatpush1.msra.mxu0 0.0
    %562 = vmatprep.subr.mxu0 0.0
    %563 = vmatpush1.msra.mxu0 0.0
    %564 = vmatprep.subr.mxu0 0.0
    %565 = vmatpush1.msra.mxu0 0.0
    %566 = vmatprep.subr.mxu0 0.0
    %567 = vmatpush1.msra.mxu0 0.0
    %568 = vmatprep.subr.mxu0 0.0
    %569 = vmatpush1.msra.mxu0 0.0
    %570 = vmatprep.subr.mxu0 0.0
    %571 = vmatpush1.msra.mxu0 0.0
    %572 = vmatprep.subr.mxu0 0.0
    %573 = vmatpush1.msra.mxu0 0.0
    %574 = vmatprep.subr.mxu0 0.0
    %575 = vmatpush1.msra.mxu0 0.0
    %576 = vmatprep.subr.mxu0 0.0
    %577 = vmatpush1.msra.mxu0 0.0
    %578 = vmatprep.subr.mxu0 0.0
    %579 = vmatpush1.msra.mxu0 0.0
    %580 = vmatprep.subr.mxu0 0.0
    %581 = vmatpush1.msra.mxu0 0.0
    %582 = vmatprep.subr.mxu0 0.0
    %583 = vmatpush1.msra.mxu0 0.0
    %584 = vmatprep.mubr.f32.mxu0 0.0
    %585 = vmatmul.mubr.f32.gmra.mrb[0].mxu0 %v509
    %v586 = vpop.f32.mrb[0].mxu0
    %v587 = vadd.f32 0.0, %v586
    %v588 = vpop.f32.mrb[0].mxu0
    %589 = vmatprep.mubr.f32.mxu0 0.0
    %590 = vmatmul.mubr.f32.gmra.mrb[0].mxu0 %v512
    %v591 = vpop.f32.mrb[0].mxu0
    %v592 = vadd.f32 0.0, %v591
    %v593 = vpop.f32.mrb[0].mxu0
    %594 = vmatprep.mubr.f32.mxu0 0.0
    %595 = vmatmul.mubr.f32.gmra.mrb[0].mxu0 %v515
    %v596 = vpop.f32.mrb[0].mxu0
    %v597 = vadd.f32 0.0, %v596
    %v598 = vpop.f32.mrb[0].mxu0
    %599 = vmatprep.mubr.f32.mxu0 0.0
    %600 = vmatmul.mubr.f32.gmra.mrb[0].mxu0 %v518
    %v601 = vpop.f32.mrb[0].mxu0
    %v602 = vadd.f32 0.0, %v601
    %v603 = vpop.f32.mrb[0].mxu0
    %604 = vdwg.mxu0
    %609 = vrot.lane.b32.xlu0 %v587, 127
    %v610 = vpop.permute.xlu0 %609
    %611 = vrot.lane.b32.xlu0 %v592, 127
    %v612 = vpop.permute.xlu0 %611
    %613 = vrot.lane.b32.xlu0 %v597, 127
    %v614 = vpop.permute.xlu0 %613
    %615 = vrot.lane.b32.xlu0 %v602, 127
    %v616 = vpop.permute.xlu0 %615
    %v621 = vsel %vm64, %v587, %v610
    %v622 = vsel %vm65, %v592, %v612
    %v623 = vsel %vm66, %v597, %v614
    %v624 = vsel %vm67, %v602, %v616
    %vm625 = vcmp.gt.f32.partialorder %v478, 0.0
    %vm626 = vcmp.gt.f32.partialorder %v481, 0.0
    %vm627 = vcmp.gt.f32.partialorder %v484, 0.0
    %vm628 = vcmp.gt.f32.partialorder %v487, 0.0
    %v629 = vsel %vm625, %v478, 1.0
    %v630 = vsel %vm626, %v481, 1.0
    %v631 = vsel %vm627, %v484, 1.0
    %v632 = vsel %vm628, %v487, 1.0
    %v633 = vrcp.pop %v629
    %v634 = vmul.f32 %v621, %v633
    %v635 = vrcp.pop %v630
    %v636 = vmul.f32 %v622, %v635
    %v637 = vrcp.pop %v631
    %v638 = vmul.f32 %v623, %v637
    %v639 = vrcp.pop %v632
    %v640 = vmul.f32 %v624, %v639
    %v641 = vsel %vm625, %v634, 0.0
    %v642 = vsel %vm626, %v636, 0.0
    %v643 = vsel %vm627, %v638, 0.0
    %v644 = vsel %vm628, %v640, 0.0
    %v645 = vmul.f32 %v641, 0.5
    %v646 = vmul.f32 %v642, 0.5
    %v647 = vmul.f32 %v643, 0.5
    %v648 = vmul.f32 %v644, 0.5
    %v649 = vmul.f32 %v641, 0.70710677
    %v650 = vmul.f32 %v642, 0.70710677
    %v651 = vmul.f32 %v643, 0.70710677
    %v652 = vmul.f32 %v644, 0.70710677
    %v653 = vand.u32 2147483647, %v649
    %v654 = vand.u32 2147483647, %v650
    %v655 = vand.u32 2147483647, %v651
    %v656 = vand.u32 2147483647, %v652
    %v657 = vmul.f32 %v653, 0.3275911
    %v658 = vmul.f32 %v654, 0.3275911
    %v659 = vmul.f32 %v655, 0.3275911
    %v660 = vmul.f32 %v656, 0.3275911
    %v661 = vadd.f32 %v657, 1.0
    %v662 = vadd.f32 %v658, 1.0
    %v663 = vadd.f32 %v659, 1.0
    %v664 = vadd.f32 %v660, 1.0
    %v665 = vrcp.pop %v661
    %v666 = vmul.f32 1.0, %v665
    %v667 = vrcp.pop %v662
    %v668 = vmul.f32 1.0, %v667
    %v669 = vrcp.pop %v663
    %v670 = vmul.f32 1.0, %v669
    %v671 = vrcp.pop %v664
    %v672 = vmul.f32 1.0, %v671
    %v673 = vmul.f32 %v666, 1.0614054
    %v674 = vmul.f32 %v668, 1.0614054
    %v675 = vmul.f32 %v670, 1.0614054
    %v676 = vmul.f32 %v672, 1.0614054
    %v677 = vadd.f32 %v673, -1.4531521
    %v678 = vadd.f32 %v674, -1.4531521
    %v679 = vadd.f32 %v675, -1.4531521
    %v680 = vadd.f32 %v676, -1.4531521
    %v681 = vmul.f32 %v677, %v666
    %v682 = vmul.f32 %v678, %v668
    %v683 = vmul.f32 %v679, %v670
    %v684 = vmul.f32 %v680, %v672
    %v685 = vadd.f32 %v681, 1.4214138
    %v686 = vadd.f32 %v682, 1.4214138
    %v687 = vadd.f32 %v683, 1.4214138
    %v688 = vadd.f32 %v684, 1.4214138
    %v689 = vmul.f32 %v685, %v666
    %v690 = vmul.f32 %v686, %v668
    %v691 = vmul.f32 %v687, %v670
    %v692 = vmul.f32 %v688, %v672
    %v693 = vadd.f32 %v689, -0.28449672
    %v694 = vadd.f32 %v690, -0.28449672
    %v695 = vadd.f32 %v691, -0.28449672
    %v696 = vadd.f32 %v692, -0.28449672
    %v697 = vmul.f32 %v693, %v666
    %v698 = vmul.f32 %v694, %v668
    %v699 = vmul.f32 %v695, %v670
    %v700 = vmul.f32 %v696, %v672
    %v701 = vadd.f32 %v697, 0.2548296
    %v702 = vadd.f32 %v698, 0.2548296
    %v703 = vadd.f32 %v699, 0.2548296
    %v704 = vadd.f32 %v700, 0.2548296
    %v705 = vmul.f32 %v701, %v666
    %v706 = vmul.f32 %v702, %v668
    %v707 = vmul.f32 %v703, %v670
    %v708 = vmul.f32 %v704, %v672
    %v709 = vsub.f32 0.0, %v653
    %v710 = vsub.f32 0.0, %v654
    %v711 = vsub.f32 0.0, %v655
    %v712 = vsub.f32 0.0, %v656
    %v713 = vmul.f32 %v709, %v653
    %v714 = vmul.f32 %v710, %v654
    %v715 = vmul.f32 %v711, %v655
    %v716 = vmul.f32 %v712, %v656
    %v717 = vmul.f32 %v713, 1.442695
    %v718 = vpow.pop %v717
    %v719 = vmul.f32 %v714, 1.442695
    %v720 = vpow.pop %v719
    %v721 = vmul.f32 %v715, 1.442695
    %v722 = vpow.pop %v721
    %v723 = vmul.f32 %v716, 1.442695
    %v724 = vpow.pop %v723
    %v725 = vmul.f32 %v705, %v718
    %v726 = vmul.f32 %v706, %v720
    %v727 = vmul.f32 %v707, %v722
    %v728 = vmul.f32 %v708, %v724
    %v729 = vsub.f32 1.0, %v725
    %v730 = vsub.f32 1.0, %v726
    %v731 = vsub.f32 1.0, %v727
    %v732 = vsub.f32 1.0, %v728
    %vm733 = vcmp.ge.f32.partialorder %v649, 0.0
    %vm734 = vcmp.ge.f32.partialorder %v650, 0.0
    %vm735 = vcmp.ge.f32.partialorder %v651, 0.0
    %vm736 = vcmp.ge.f32.partialorder %v652, 0.0
    %v737 = vsub.f32 0.0, %v729
    %v738 = vsub.f32 0.0, %v730
    %v739 = vsub.f32 0.0, %v731
    %v740 = vsub.f32 0.0, %v732
    %v741 = vsel %vm733, %v729, %v737
    %v742 = vsel %vm734, %v730, %v738
    %v743 = vsel %vm735, %v731, %v739
    %v744 = vsel %vm736, %v732, %v740
    %v745 = vadd.f32 %v741, 1.0
    %v746 = vadd.f32 %v742, 1.0
    %v747 = vadd.f32 %v743, 1.0
    %v748 = vadd.f32 %v744, 1.0
    %v749 = vmul.f32 %v645, %v745
    %v750 = vmul.f32 %v646, %v746
    %v751 = vmul.f32 %v647, %v747
    %v752 = vmul.f32 %v648, %v748
    %s753 = sld [smem:[#allocation2 + $0x8]]
    %s754 = sld [smem:[#allocation2 + $0x9]]
    %v755 = vstv %s753
    %v756 = vstv %s754
    %v757 = vsel %vm64, %v755, %v756
    %v758 = vsel %vm65, %v755, %v756
    %v759 = vsel %vm66, %v755, %v756
    %v760 = vsel %vm67, %v755, %v756
    %v761 = vmul.f32 %v749, %v757
    %v762 = vmul.f32 %v750, %v758
    %v763 = vmul.f32 %v751, %v759
    %v764 = vmul.f32 %v752, %v760
    %s765 = sld [smem:[#allocation2 + $0xa]]
    %s766 = sld [smem:[#allocation2 + $0xb]]
    %v767 = vstv %s765
    %v768 = vstv %s766
    %v769 = vsel %vm64, %v767, %v768
    %v770 = vsel %vm65, %v767, %v768
    %v771 = vsel %vm66, %v767, %v768
    %v772 = vsel %vm67, %v767, %v768
    %v773 = vadd.f32 %v761, %v769
    %v774 = vadd.f32 %v762, %v770
    %v775 = vadd.f32 %v763, %v771
    %v776 = vadd.f32 %v764, %v772
    %s777 = sld [smem:[#allocation5]]
    %v778 = vstv %s777
    %v779 = vmul.f32 %v773, %v778
    %v780 = vmul.f32 %v774, %v778
    %v781 = vmul.f32 %v775, %v778
    %v782 = vmul.f32 %v776, %v778
    %v783 = vadd.f32 %v779, 0.0
    %v784 = vadd.f32 %v780, 0.0
    %v785 = vadd.f32 %v781, 0.0
    %v786 = vadd.f32 %v782, 0.0
    %787 = vrot.lane.b32.xlu0 %v139, 120
    %v788 = vpop.permute.xlu0 %787
    %789 = vrot.lane.b32.xlu0 %v142, 120
    %v790 = vpop.permute.xlu0 %789
    %791 = vrot.lane.b32.xlu0 %v147, 120
    %v792 = vpop.permute.xlu0 %791
    %793 = vrot.lane.b32.xlu0 %v150, 120
    %v794 = vpop.permute.xlu0 %793
    %799 = vrot.lane.b32.xlu0 %v139, 119
    %v800 = vpop.permute.xlu0 %799
    %801 = vrot.lane.b32.xlu0 %v142, 119
    %v802 = vpop.permute.xlu0 %801
    %803 = vrot.lane.b32.xlu0 %v147, 119
    %v804 = vpop.permute.xlu0 %803
    %805 = vrot.lane.b32.xlu0 %v150, 119
    %v806 = vpop.permute.xlu0 %805
    %v811 = vsel %vm64, %v788, %v800
    %v812 = vsel %vm65, %v790, %v802
    %v813 = vsel %vm66, %v792, %v804
    %v814 = vsel %vm67, %v794, %v806
    %815 = vrot.lane.b32.xlu0 %v139, 118
    %v816 = vpop.permute.xlu0 %815
    %817 = vrot.lane.b32.xlu0 %v142, 118
    %v818 = vpop.permute.xlu0 %817
    %819 = vrot.lane.b32.xlu0 %v147, 118
    %v820 = vpop.permute.xlu0 %819
    %821 = vrot.lane.b32.xlu0 %v150, 118
    %v822 = vpop.permute.xlu0 %821
    %827 = vrot.lane.b32.xlu0 %v139, 117
    %v828 = vpop.permute.xlu0 %827
    %829 = vrot.lane.b32.xlu0 %v142, 117
    %v830 = vpop.permute.xlu0 %829
    %831 = vrot.lane.b32.xlu0 %v147, 117
    %v832 = vpop.permute.xlu0 %831
    %833 = vrot.lane.b32.xlu0 %v150, 117
    %v834 = vpop.permute.xlu0 %833
    %v839 = vsel %vm64, %v816, %v828
    %v840 = vsel %vm65, %v818, %v830
    %v841 = vsel %vm66, %v820, %v832
    %v842 = vsel %vm67, %v822, %v834
    %843 = vrot.lane.b32.xlu0 %v139, 116
    %v844 = vpop.permute.xlu0 %843
    %845 = vrot.lane.b32.xlu0 %v142, 116
    %v846 = vpop.permute.xlu0 %845
    %847 = vrot.lane.b32.xlu0 %v147, 116
    %v848 = vpop.permute.xlu0 %847
    %849 = vrot.lane.b32.xlu0 %v150, 116
    %v850 = vpop.permute.xlu0 %849
    %855 = vrot.lane.b32.xlu0 %v139, 115
    %v856 = vpop.permute.xlu0 %855
    %857 = vrot.lane.b32.xlu0 %v142, 115
    %v858 = vpop.permute.xlu0 %857
    %859 = vrot.lane.b32.xlu0 %v147, 115
    %v860 = vpop.permute.xlu0 %859
    %861 = vrot.lane.b32.xlu0 %v150, 115
    %v862 = vpop.permute.xlu0 %861
    %v867 = vsel %vm64, %v844, %v856
    %v868 = vsel %vm65, %v846, %v858
    %v869 = vsel %vm66, %v848, %v860
    %v870 = vsel %vm67, %v850, %v862
    %s871 = sld [smem:[#allocation2 + $0x10]]
    %s872 = sld [smem:[#allocation2 + $0x12]]
    %v873 = vstv %s871
    %v874 = vstv %s872
    %v875 = vsel %vm64, %v873, %v874
    %v876 = vsel %vm65, %v873, %v874
    %v877 = vsel %vm66, %v873, %v874
    %v878 = vsel %vm67, %v873, %v874
    %v879 = vmul.f32 %v839, %v875
    %v880 = vmul.f32 %v840, %v876
    %v881 = vmul.f32 %v841, %v877
    %v882 = vmul.f32 %v842, %v878
    %s883 = sld [smem:[#allocation2 + $0x11]]
    %s884 = sld [smem:[#allocation2 + $0x13]]
    %v885 = vstv %s883
    %v886 = vstv %s884
    %v887 = vsel %vm64, %v885, %v886
    %v888 = vsel %vm65, %v885, %v886
    %v889 = vsel %vm66, %v885, %v886
    %v890 = vsel %vm67, %v885, %v886
    %v891 = vmul.f32 %v839, %v887
    %v892 = vmul.f32 %v840, %v888
    %v893 = vmul.f32 %v841, %v889
    %v894 = vmul.f32 %v842, %v890
    %s895 = sld [smem:[#allocation2 + $0x14]]
    %s896 = sld [smem:[#allocation2 + $0x16]]
    %v897 = vstv %s895
    %v898 = vstv %s896
    %v899 = vsel %vm64, %v897, %v898
    %v900 = vsel %vm65, %v897, %v898
    %v901 = vsel %vm66, %v897, %v898
    %v902 = vsel %vm67, %v897, %v898
    %v903 = vmul.f32 %v867, %v899
    %v904 = vmul.f32 %v868, %v900
    %v905 = vmul.f32 %v869, %v901
    %v906 = vmul.f32 %v870, %v902
    %s907 = sld [smem:[#allocation2 + $0x15]]
    %s908 = sld [smem:[#allocation2 + $0x17]]
    %v909 = vstv %s907
    %v910 = vstv %s908
    %v911 = vsel %vm64, %v909, %v910
    %v912 = vsel %vm65, %v909, %v910
    %v913 = vsel %vm66, %v909, %v910
    %v914 = vsel %vm67, %v909, %v910
    %v915 = vmul.f32 %v867, %v911
    %v916 = vmul.f32 %v868, %v912
    %v917 = vmul.f32 %v869, %v913
    %v918 = vmul.f32 %v870, %v914
    %v919 = vmul.f32 %v811, %v60
    %v920 = vmul.f32 %v812, %v61
    %v921 = vmul.f32 %v813, %v62
    %v922 = vmul.f32 %v814, %v63
    %v923 = vmul.f32 %v811, %v68
    %v924 = vmul.f32 %v812, %v69
    %v925 = vmul.f32 %v813, %v70
    %v926 = vmul.f32 %v814, %v71
    %931 = vrot.lane.b32.xlu0 %v923, 1
    %v932 = vpop.permute.xlu0 %931
    %933 = vrot.lane.b32.xlu0 %v924, 1
    %v934 = vpop.permute.xlu0 %933
    %935 = vrot.lane.b32.xlu0 %v925, 1
    %v936 = vpop.permute.xlu0 %935
    %937 = vrot.lane.b32.xlu0 %v926, 1
    %v938 = vpop.permute.xlu0 %937
    %v943 = vsel %vm301, %v919, %v932
    %v944 = vsel %vm301, %v920, %v934
    %v945 = vsel %vm301, %v921, %v936
    %v946 = vsel %vm301, %v922, %v938
    %951 = vrot.lane.b32.xlu0 %v891, 1
    %v952 = vpop.permute.xlu0 %951
    %953 = vrot.lane.b32.xlu0 %v892, 1
    %v954 = vpop.permute.xlu0 %953
    %955 = vrot.lane.b32.xlu0 %v893, 1
    %v956 = vpop.permute.xlu0 %955
    %957 = vrot.lane.b32.xlu0 %v894, 1
    %v958 = vpop.permute.xlu0 %957
    %v963 = vsel %vm301, %v879, %v952
    %v964 = vsel %vm301, %v880, %v954
    %v965 = vsel %vm301, %v881, %v956
    %v966 = vsel %vm301, %v882, %v958
    %v968 = vsel %vm326, %v943, 0
    %v971 = vsel %vm326, %v944, 0
    %v974 = vsel %vm326, %v945, 0
    %v977 = vsel %vm326, %v946, 0
    %v980 = vsel %vm326, %v963, 0
    %v983 = vsel %vm326, %v964, 0
    %v986 = vsel %vm326, %v965, 0
    %v989 = vsel %vm326, %v966, 0
    %991 = vmatprep.subr.mxu0 0.0
    %992 = vmatpush1.xpose.msra.mxu0 %v980
    %993 = vmatprep.subr.mxu0 0.0
    %994 = vmatpush1.xpose.msra.mxu0 %v983
    %995 = vmatprep.subr.mxu0 0.0
    %996 = vmatpush1.xpose.msra.mxu0 %v986
    %997 = vmatprep.subr.mxu0 0.0
    %998 = vmatpush1.xpose.msra.mxu0 %v989
    %999 = vmatprep.subr.mxu0 0.0
    %1000 = vmatpush1.xpose.msra.mxu0 0.0
    %1001 = vmatprep.subr.mxu0 0.0
    %1002 = vmatpush1.xpose.msra.mxu0 0.0
    %1003 = vmatprep.subr.mxu0 0.0
    %1004 = vmatpush1.xpose.msra.mxu0 0.0
    %1005 = vmatprep.subr.mxu0 0.0
    %1006 = vmatpush1.xpose.msra.mxu0 0.0
    %1007 = vmatprep.subr.mxu0 0.0
    %1008 = vmatpush1.xpose.msra.mxu0 0.0
    %1009 = vmatprep.subr.mxu0 0.0
    %1010 = vmatpush1.xpose.msra.mxu0 0.0
    %1011 = vmatprep.subr.mxu0 0.0
    %1012 = vmatpush1.xpose.msra.mxu0 0.0
    %1013 = vmatprep.subr.mxu0 0.0
    %1014 = vmatpush1.xpose.msra.mxu0 0.0
    %1015 = vmatprep.subr.mxu0 0.0
    %1016 = vmatpush1.xpose.msra.mxu0 0.0
    %1017 = vmatprep.subr.mxu0 0.0
    %1018 = vmatpush1.xpose.msra.mxu0 0.0
    %1019 = vmatprep.subr.mxu0 0.0
    %1020 = vmatpush1.xpose.msra.mxu0 0.0
    %1021 = vmatprep.subr.mxu0 0.0
    %1022 = vmatpush1.xpose.msra.mxu0 0.0
    %1023 = vmatprep.subr.mxu0 0.0
    %1024 = vmatpush1.xpose.msra.mxu0 0.0
    %1025 = vmatprep.subr.mxu0 0.0
    %1026 = vmatpush1.xpose.msra.mxu0 0.0
    %1027 = vmatprep.subr.mxu0 0.0
    %1028 = vmatpush1.xpose.msra.mxu0 0.0
    %1029 = vmatprep.subr.mxu0 0.0
    %1030 = vmatpush1.xpose.msra.mxu0 0.0
    %1031 = vmatprep.subr.mxu0 0.0
    %1032 = vmatpush1.xpose.msra.mxu0 0.0
    %1033 = vmatprep.subr.mxu0 0.0
    %1034 = vmatpush1.xpose.msra.mxu0 0.0
    %1035 = vmatprep.subr.mxu0 0.0
    %1036 = vmatpush1.xpose.msra.mxu0 0.0
    %1037 = vmatprep.subr.mxu0 0.0
    %1038 = vmatpush1.xpose.msra.mxu0 0.0
    %1039 = vmatprep.subr.mxu0 0.0
    %1040 = vmatpush1.xpose.msra.mxu0 0.0
    %1041 = vmatprep.subr.mxu0 0.0
    %1042 = vmatpush1.xpose.msra.mxu0 0.0
    %1043 = vmatprep.subr.mxu0 0.0
    %1044 = vmatpush1.xpose.msra.mxu0 0.0
    %1045 = vmatprep.subr.mxu0 0.0
    %1046 = vmatpush1.xpose.msra.mxu0 0.0
    %1047 = vmatprep.subr.mxu0 0.0
    %1048 = vmatpush1.xpose.msra.mxu0 0.0
    %1049 = vmatprep.subr.mxu0 0.0
    %1050 = vmatpush1.xpose.msra.mxu0 0.0
    %1051 = vmatprep.subr.mxu0 0.0
    %1052 = vmatpush1.xpose.msra.mxu0 0.0
    %1053 = vmatprep.subr.mxu0 0.0
    %1054 = vmatpush1.xpose.msra.mxu0 0.0
    %1055 = vmatprep.mubr.f32.mxu0 0.0
    %1056 = vmatmul.mubr.f32.gmra.mrb[0].mxu0 %v968
    %v1057 = vpop.f32.mrb[0].mxu0
    %v1058 = vadd.f32 0.0, %v1057
    %v1059 = vpop.f32.mrb[0].mxu0
    %1060 = vmatprep.mubr.f32.mxu0 0.0
    %1061 = vmatmul.mubr.f32.gmra.mrb[0].mxu0 %v971
    %v1062 = vpop.f32.mrb[0].mxu0
    %v1063 = vadd.f32 0.0, %v1062
    %v1064 = vpop.f32.mrb[0].mxu0
    %1065 = vmatprep.mubr.f32.mxu0 0.0
    %1066 = vmatmul.mubr.f32.gmra.mrb[0].mxu0 %v974
    %v1067 = vpop.f32.mrb[0].mxu0
    %v1068 = vadd.f32 0.0, %v1067
    %v1069 = vpop.f32.mrb[0].mxu0
    %1070 = vmatprep.mubr.f32.mxu0 0.0
    %1071 = vmatmul.mubr.f32.gmra.mrb[0].mxu0 %v977
    %v1072 = vpop.f32.mrb[0].mxu0
    %v1073 = vadd.f32 0.0, %v1072
    %v1074 = vpop.f32.mrb[0].mxu0
    %1075 = vdwg.mxu0
    %s1076 = scalar_lea.vmem %s6, 32
    %v1077 = vld [vmem:[%s1076] sm:$0xff]
    %v1078 = vld [vmem:[%s1076 + $0x8] sm:$0xff]
    %v1079 = vld [vmem:[%s1076 + $0x10] sm:$0xff]
    %v1080 = vld [vmem:[%s1076 + $0x18] sm:$0xff]
    %vm1081 = vcmp.gt.f32.partialorder %v1077, 0.0
    %vm1082 = vcmp.gt.f32.partialorder %v1078, 0.0
    %vm1083 = vcmp.gt.f32.partialorder %v1079, 0.0
    %vm1084 = vcmp.gt.f32.partialorder %v1080, 0.0
    %v1085 = vsel %vm1081, %v1058, -1e+30
    %v1086 = vsel %vm1082, %v1063, -1e+30
    %v1087 = vsel %vm1083, %v1068, -1e+30
    %v1088 = vsel %vm1084, %v1073, -1e+30
    %v1089 = vsel %vm97, %v1085, -inf
    %1090 = vmax.xlane.f32.xlu0 %v1089
    %v1091 = vpop.xlane.xlu0 %1090
    %v1092 = vsel %vm97, %v1086, -inf
    %1093 = vmax.xlane.f32.xlu0 %v1092
    %v1094 = vpop.xlane.xlu0 %1093
    %v1095 = vsel %vm97, %v1087, -inf
    %1096 = vmax.xlane.f32.xlu0 %v1095
    %v1097 = vpop.xlane.xlu0 %1096
    %v1098 = vsel %vm97, %v1088, -inf
    %1099 = vmax.xlane.f32.xlu0 %v1098
    %v1100 = vpop.xlane.xlu0 %1099
    %v1101 = vsub.f32 %v1085, %v1091
    %v1102 = vsub.f32 %v1086, %v1094
    %v1103 = vsub.f32 %v1087, %v1097
    %v1104 = vsub.f32 %v1088, %v1100
    %v1105 = vmul.f32 %v1101, 1.442695
    %v1106 = vpow.pop %v1105
    %v1107 = vmul.f32 %v1102, 1.442695
    %v1108 = vpow.pop %v1107
    %v1109 = vmul.f32 %v1103, 1.442695
    %v1110 = vpow.pop %v1109
    %v1111 = vmul.f32 %v1104, 1.442695
    %v1112 = vpow.pop %v1111
    %v1113 = vsel %vm1081, %v1106, 0.0
    %v1114 = vsel %vm1082, %v1108, 0.0
    %v1115 = vsel %vm1083, %v1110, 0.0
    %v1116 = vsel %vm1084, %v1112, 0.0
    %v1117 = vsel %vm97, %v1113, 0.0
    %1118 = vadd.xlane.f32.xlu0 %v1117
    %v1119 = vpop.xlane.xlu0 %1118
    %v1120 = vsel %vm97, %v1114, 0.0
    %1121 = vadd.xlane.f32.xlu0 %v1120
    %v1122 = vpop.xlane.xlu0 %1121
    %v1123 = vsel %vm97, %v1115, 0.0
    %1124 = vadd.xlane.f32.xlu0 %v1123
    %v1125 = vpop.xlane.xlu0 %1124
    %v1126 = vsel %vm97, %v1116, 0.0
    %1127 = vadd.xlane.f32.xlu0 %v1126
    %v1128 = vpop.xlane.xlu0 %1127
    %1133 = vrot.lane.b32.xlu0 %v915, 1
    %v1134 = vpop.permute.xlu0 %1133
    %1135 = vrot.lane.b32.xlu0 %v916, 1
    %v1136 = vpop.permute.xlu0 %1135
    %1137 = vrot.lane.b32.xlu0 %v917, 1
    %v1138 = vpop.permute.xlu0 %1137
    %1139 = vrot.lane.b32.xlu0 %v918, 1
    %v1140 = vpop.permute.xlu0 %1139
    %v1145 = vsel %vm301, %v903, %v1134
    %v1146 = vsel %vm301, %v904, %v1136
    %v1147 = vsel %vm301, %v905, %v1138
    %v1148 = vsel %vm301, %v906, %v1140
    %v1150 = vsel %vm97, %v1113, 0
    %v1153 = vsel %vm97, %v1114, 0
    %v1156 = vsel %vm97, %v1115, 0
    %v1159 = vsel %vm97, %v1116, 0
    %1161 = vmatprep.subr.mxu0 0.0
    %1162 = vmatpush1.msra.mxu0 %v1145
    %1163 = vmatprep.subr.mxu0 0.0
    %1164 = vmatpush1.msra.mxu0 %v1146
    %1165 = vmatprep.subr.mxu0 0.0
    %1166 = vmatpush1.msra.mxu0 %v1147
    %1167 = vmatprep.subr.mxu0 0.0
    %1168 = vmatpush1.msra.mxu0 %v1148
    %1169 = vmatprep.subr.mxu0 0.0
    %1170 = vmatpush1.msra.mxu0 0.0
    %1171 = vmatprep.subr.mxu0 0.0
    %1172 = vmatpush1.msra.mxu0 0.0
    %1173 = vmatprep.subr.mxu0 0.0
    %1174 = vmatpush1.msra.mxu0 0.0
    %1175 = vmatprep.subr.mxu0 0.0
    %1176 = vmatpush1.msra.mxu0 0.0
    %1177 = vmatprep.subr.mxu0 0.0
    %1178 = vmatpush1.msra.mxu0 0.0
    %1179 = vmatprep.subr.mxu0 0.0
    %1180 = vmatpush1.msra.mxu0 0.0
    %1181 = vmatprep.subr.mxu0 0.0
    %1182 = vmatpush1.msra.mxu0 0.0
    %1183 = vmatprep.subr.mxu0 0.0
    %1184 = vmatpush1.msra.mxu0 0.0
    %1185 = vmatprep.subr.mxu0 0.0
    %1186 = vmatpush1.msra.mxu0 0.0
    %1187 = vmatprep.subr.mxu0 0.0
    %1188 = vmatpush1.msra.mxu0 0.0
    %1189 = vmatprep.subr.mxu0 0.0
    %1190 = vmatpush1.msra.mxu0 0.0
    %1191 = vmatprep.subr.mxu0 0.0
    %1192 = vmatpush1.msra.mxu0 0.0
    %1193 = vmatprep.subr.mxu0 0.0
    %1194 = vmatpush1.msra.mxu0 0.0
    %1195 = vmatprep.subr.mxu0 0.0
    %1196 = vmatpush1.msra.mxu0 0.0
    %1197 = vmatprep.subr.mxu0 0.0
    %1198 = vmatpush1.msra.mxu0 0.0
    %1199 = vmatprep.subr.mxu0 0.0
    %1200 = vmatpush1.msra.mxu0 0.0
    %1201 = vmatprep.subr.mxu0 0.0
    %1202 = vmatpush1.msra.mxu0 0.0
    %1203 = vmatprep.subr.mxu0 0.0
    %1204 = vmatpush1.msra.mxu0 0.0
    %1205 = vmatprep.subr.mxu0 0.0
    %1206 = vmatpush1.msra.mxu0 0.0
    %1207 = vmatprep.subr.mxu0 0.0
    %1208 = vmatpush1.msra.mxu0 0.0
    %1209 = vmatprep.subr.mxu0 0.0
    %1210 = vmatpush1.msra.mxu0 0.0
    %1211 = vmatprep.subr.mxu0 0.0
    %1212 = vmatpush1.msra.mxu0 0.0
    %1213 = vmatprep.subr.mxu0 0.0
    %1214 = vmatpush1.msra.mxu0 0.0
    %1215 = vmatprep.subr.mxu0 0.0
    %1216 = vmatpush1.msra.mxu0 0.0
    %1217 = vmatprep.subr.mxu0 0.0
    %1218 = vmatpush1.msra.mxu0 0.0
    %1219 = vmatprep.subr.mxu0 0.0
    %1220 = vmatpush1.msra.mxu0 0.0
    %1221 = vmatprep.subr.mxu0 0.0
    %1222 = vmatpush1.msra.mxu0 0.0
    %1223 = vmatprep.subr.mxu0 0.0
    %1224 = vmatpush1.msra.mxu0 0.0
    %1225 = vmatprep.mubr.f32.mxu0 0.0
    %1226 = vmatmul.mubr.f32.gmra.mrb[0].mxu0 %v1150
    %v1227 = vpop.f32.mrb[0].mxu0
    %v1228 = vadd.f32 0.0, %v1227
    %v1229 = vpop.f32.mrb[0].mxu0
    %1230 = vmatprep.mubr.f32.mxu0 0.0
    %1231 = vmatmul.mubr.f32.gmra.mrb[0].mxu0 %v1153
    %v1232 = vpop.f32.mrb[0].mxu0
    %v1233 = vadd.f32 0.0, %v1232
    %v1234 = vpop.f32.mrb[0].mxu0
    %1235 = vmatprep.mubr.f32.mxu0 0.0
    %1236 = vmatmul.mubr.f32.gmra.mrb[0].mxu0 %v1156
    %v1237 = vpop.f32.mrb[0].mxu0
    %v1238 = vadd.f32 0.0, %v1237
    %v1239 = vpop.f32.mrb[0].mxu0
    %1240 = vmatprep.mubr.f32.mxu0 0.0
    %1241 = vmatmul.mubr.f32.gmra.mrb[0].mxu0 %v1159
    %v1242 = vpop.f32.mrb[0].mxu0
    %v1243 = vadd.f32 0.0, %v1242
    %v1244 = vpop.f32.mrb[0].mxu0
    %1245 = vdwg.mxu0
    %1250 = vrot.lane.b32.xlu0 %v1228, 127
    %v1251 = vpop.permute.xlu0 %1250
    %1252 = vrot.lane.b32.xlu0 %v1233, 127
    %v1253 = vpop.permute.xlu0 %1252
    %1254 = vrot.lane.b32.xlu0 %v1238, 127
    %v1255 = vpop.permute.xlu0 %1254
    %1256 = vrot.lane.b32.xlu0 %v1243, 127
    %v1257 = vpop.permute.xlu0 %1256
    %v1262 = vsel %vm64, %v1228, %v1251
    %v1263 = vsel %vm65, %v1233, %v1253
    %v1264 = vsel %vm66, %v1238, %v1255
    %v1265 = vsel %vm67, %v1243, %v1257
    %vm1266 = vcmp.gt.f32.partialorder %v1119, 0.0
    %vm1267 = vcmp.gt.f32.partialorder %v1122, 0.0
    %vm1268 = vcmp.gt.f32.partialorder %v1125, 0.0
    %vm1269 = vcmp.gt.f32.partialorder %v1128, 0.0
    %v1270 = vsel %vm1266, %v1119, 1.0
    %v1271 = vsel %vm1267, %v1122, 1.0
    %v1272 = vsel %vm1268, %v1125, 1.0
    %v1273 = vsel %vm1269, %v1128, 1.0
    %v1274 = vrcp.pop %v1270
    %v1275 = vmul.f32 %v1262, %v1274
    %v1276 = vrcp.pop %v1271
    %v1277 = vmul.f32 %v1263, %v1276
    %v1278 = vrcp.pop %v1272
    %v1279 = vmul.f32 %v1264, %v1278
    %v1280 = vrcp.pop %v1273
    %v1281 = vmul.f32 %v1265, %v1280
    %v1282 = vsel %vm1266, %v1275, 0.0
    %v1283 = vsel %vm1267, %v1277, 0.0
    %v1284 = vsel %vm1268, %v1279, 0.0
    %v1285 = vsel %vm1269, %v1281, 0.0
    %v1286 = vmul.f32 %v1282, 0.5
    %v1287 = vmul.f32 %v1283, 0.5
    %v1288 = vmul.f32 %v1284, 0.5
    %v1289 = vmul.f32 %v1285, 0.5
    %v1290 = vmul.f32 %v1282, 0.70710677
    %v1291 = vmul.f32 %v1283, 0.70710677
    %v1292 = vmul.f32 %v1284, 0.70710677
    %v1293 = vmul.f32 %v1285, 0.70710677
    %v1294 = vand.u32 2147483647, %v1290
    %v1295 = vand.u32 2147483647, %v1291
    %v1296 = vand.u32 2147483647, %v1292
    %v1297 = vand.u32 2147483647, %v1293
    %v1298 = vmul.f32 %v1294, 0.3275911
    %v1299 = vmul.f32 %v1295, 0.3275911
    %v1300 = vmul.f32 %v1296, 0.3275911
    %v1301 = vmul.f32 %v1297, 0.3275911
    %v1302 = vadd.f32 %v1298, 1.0
    %v1303 = vadd.f32 %v1299, 1.0
    %v1304 = vadd.f32 %v1300, 1.0
    %v1305 = vadd.f32 %v1301, 1.0
    %v1306 = vrcp.pop %v1302
    %v1307 = vmul.f32 1.0, %v1306
    %v1308 = vrcp.pop %v1303
    %v1309 = vmul.f32 1.0, %v1308
    %v1310 = vrcp.pop %v1304
    %v1311 = vmul.f32 1.0, %v1310
    %v1312 = vrcp.pop %v1305
    %v1313 = vmul.f32 1.0, %v1312
    %v1314 = vmul.f32 %v1307, 1.0614054
    %v1315 = vmul.f32 %v1309, 1.0614054
    %v1316 = vmul.f32 %v1311, 1.0614054
    %v1317 = vmul.f32 %v1313, 1.0614054
    %v1318 = vadd.f32 %v1314, -1.4531521
    %v1319 = vadd.f32 %v1315, -1.4531521
    %v1320 = vadd.f32 %v1316, -1.4531521
    %v1321 = vadd.f32 %v1317, -1.4531521
    %v1322 = vmul.f32 %v1318, %v1307
    %v1323 = vmul.f32 %v1319, %v1309
    %v1324 = vmul.f32 %v1320, %v1311
    %v1325 = vmul.f32 %v1321, %v1313
    %v1326 = vadd.f32 %v1322, 1.4214138
    %v1327 = vadd.f32 %v1323, 1.4214138
    %v1328 = vadd.f32 %v1324, 1.4214138
    %v1329 = vadd.f32 %v1325, 1.4214138
    %v1330 = vmul.f32 %v1326, %v1307
    %v1331 = vmul.f32 %v1327, %v1309
    %v1332 = vmul.f32 %v1328, %v1311
    %v1333 = vmul.f32 %v1329, %v1313
    %v1334 = vadd.f32 %v1330, -0.28449672
    %v1335 = vadd.f32 %v1331, -0.28449672
    %v1336 = vadd.f32 %v1332, -0.28449672
    %v1337 = vadd.f32 %v1333, -0.28449672
    %v1338 = vmul.f32 %v1334, %v1307
    %v1339 = vmul.f32 %v1335, %v1309
    %v1340 = vmul.f32 %v1336, %v1311
    %v1341 = vmul.f32 %v1337, %v1313
    %v1342 = vadd.f32 %v1338, 0.2548296
    %v1343 = vadd.f32 %v1339, 0.2548296
    %v1344 = vadd.f32 %v1340, 0.2548296
    %v1345 = vadd.f32 %v1341, 0.2548296
    %v1346 = vmul.f32 %v1342, %v1307
    %v1347 = vmul.f32 %v1343, %v1309
    %v1348 = vmul.f32 %v1344, %v1311
    %v1349 = vmul.f32 %v1345, %v1313
    %v1350 = vsub.f32 0.0, %v1294
    %v1351 = vsub.f32 0.0, %v1295
    %v1352 = vsub.f32 0.0, %v1296
    %v1353 = vsub.f32 0.0, %v1297
    %v1354 = vmul.f32 %v1350, %v1294
    %v1355 = vmul.f32 %v1351, %v1295
    %v1356 = vmul.f32 %v1352, %v1296
    %v1357 = vmul.f32 %v1353, %v1297
    %v1358 = vmul.f32 %v1354, 1.442695
    %v1359 = vpow.pop %v1358
    %v1360 = vmul.f32 %v1355, 1.442695
    %v1361 = vpow.pop %v1360
    %v1362 = vmul.f32 %v1356, 1.442695
    %v1363 = vpow.pop %v1362
    %v1364 = vmul.f32 %v1357, 1.442695
    %v1365 = vpow.pop %v1364
    %v1366 = vmul.f32 %v1346, %v1359
    %v1367 = vmul.f32 %v1347, %v1361
    %v1368 = vmul.f32 %v1348, %v1363
    %v1369 = vmul.f32 %v1349, %v1365
    %v1370 = vsub.f32 1.0, %v1366
    %v1371 = vsub.f32 1.0, %v1367
    %v1372 = vsub.f32 1.0, %v1368
    %v1373 = vsub.f32 1.0, %v1369
    %vm1374 = vcmp.ge.f32.partialorder %v1290, 0.0
    %vm1375 = vcmp.ge.f32.partialorder %v1291, 0.0
    %vm1376 = vcmp.ge.f32.partialorder %v1292, 0.0
    %vm1377 = vcmp.ge.f32.partialorder %v1293, 0.0
    %v1378 = vsub.f32 0.0, %v1370
    %v1379 = vsub.f32 0.0, %v1371
    %v1380 = vsub.f32 0.0, %v1372
    %v1381 = vsub.f32 0.0, %v1373
    %v1382 = vsel %vm1374, %v1370, %v1378
    %v1383 = vsel %vm1375, %v1371, %v1379
    %v1384 = vsel %vm1376, %v1372, %v1380
    %v1385 = vsel %vm1377, %v1373, %v1381
    %v1386 = vadd.f32 %v1382, 1.0
    %v1387 = vadd.f32 %v1383, 1.0
    %v1388 = vadd.f32 %v1384, 1.0
    %v1389 = vadd.f32 %v1385, 1.0
    %v1390 = vmul.f32 %v1286, %v1386
    %v1391 = vmul.f32 %v1287, %v1387
    %v1392 = vmul.f32 %v1288, %v1388
    %v1393 = vmul.f32 %v1289, %v1389
    %s1394 = sld [smem:[#allocation2 + $0x18]]
    %s1395 = sld [smem:[#allocation2 + $0x19]]
    %v1396 = vstv %s1394
    %v1397 = vstv %s1395
    %v1398 = vsel %vm64, %v1396, %v1397
    %v1399 = vsel %vm65, %v1396, %v1397
    %v1400 = vsel %vm66, %v1396, %v1397
    %v1401 = vsel %vm67, %v1396, %v1397
    %v1402 = vmul.f32 %v1390, %v1398
    %v1403 = vmul.f32 %v1391, %v1399
    %v1404 = vmul.f32 %v1392, %v1400
    %v1405 = vmul.f32 %v1393, %v1401
    %s1406 = sld [smem:[#allocation2 + $0x1a]]
    %s1407 = sld [smem:[#allocation2 + $0x1b]]
    %v1408 = vstv %s1406
    %v1409 = vstv %s1407
    %v1410 = vsel %vm64, %v1408, %v1409
    %v1411 = vsel %vm65, %v1408, %v1409
    %v1412 = vsel %vm66, %v1408, %v1409
    %v1413 = vsel %vm67, %v1408, %v1409
    %v1414 = vadd.f32 %v1402, %v1410
    %v1415 = vadd.f32 %v1403, %v1411
    %v1416 = vadd.f32 %v1404, %v1412
    %v1417 = vadd.f32 %v1405, %v1413
    %s1418 = sld [smem:[#allocation5 + $0x1]]
    %v1419 = vstv %s1418
    %v1420 = vmul.f32 %v1414, %v1419
    %v1421 = vmul.f32 %v1415, %v1419
    %v1422 = vmul.f32 %v1416, %v1419
    %v1423 = vmul.f32 %v1417, %v1419
    %v1424 = vadd.f32 %v783, %v1420
    %v1425 = vadd.f32 %v784, %v1421
    %v1426 = vadd.f32 %v785, %v1422
    %v1427 = vadd.f32 %v786, %v1423
    %s1428 = sld [smem:[#allocation5 + $0x2]]
    %v1429 = vstv %s1428
    %v1430 = vadd.f32 %v1424, %v1429
    %v1431 = vadd.f32 %v1425, %v1429
    %v1432 = vadd.f32 %v1426, %v1429
    %v1433 = vadd.f32 %v1427, %v1429
    %s1434 = sld [smem:[#allocation5 + $0x3]]
    %v1435 = vstv %s1434
    %v1436 = vmul.f32 %v1430, %v1435
    %v1437 = vmul.f32 %v1431, %v1435
    %v1438 = vmul.f32 %v1432, %v1435
    %v1439 = vmul.f32 %v1433, %v1435
    %v1440 = vtanh.pop %v1436
    %v1441 = vtanh.pop %v1437
    %v1442 = vtanh.pop %v1438
    %v1443 = vtanh.pop %v1439
    %1444 = vst.msk [vmem:[%s8] sm:$0xff] %vm301, %v1440
    %1445 = vst.msk [vmem:[%s8 + $0x8] sm:$0xff] %vm301, %v1441
    %1446 = vst.msk [vmem:[%s8 + $0x10] sm:$0xff] %vm301, %v1442
    %1447 = vst.msk [vmem:[%s8 + $0x18] sm:$0xff] %vm301, %v1443
    %v1449 = vsel %vm301, 1.0, 0
    %v1452 = vsel %vm301, %v1440, 0
    %v1455 = vsel %vm301, %v1441, 0
    %v1458 = vsel %vm301, %v1442, 0
    %v1461 = vsel %vm301, %v1443, 0
    %1463 = vmatprep.subr.mxu0 0.0
    %1464 = vmatpush1.xpose.msra.mxu0 %v1452
    %1465 = vmatprep.subr.mxu0 0.0
    %1466 = vmatpush1.xpose.msra.mxu0 %v1455
    %1467 = vmatprep.subr.mxu0 0.0
    %1468 = vmatpush1.xpose.msra.mxu0 %v1458
    %1469 = vmatprep.subr.mxu0 0.0
    %1470 = vmatpush1.xpose.msra.mxu0 %v1461
    %1471 = vmatprep.subr.mxu0 0.0
    %1472 = vmatpush1.xpose.msra.mxu0 0.0
    %1473 = vmatprep.subr.mxu0 0.0
    %1474 = vmatpush1.xpose.msra.mxu0 0.0
    %1475 = vmatprep.subr.mxu0 0.0
    %1476 = vmatpush1.xpose.msra.mxu0 0.0
    %1477 = vmatprep.subr.mxu0 0.0
    %1478 = vmatpush1.xpose.msra.mxu0 0.0
    %1479 = vmatprep.subr.mxu0 0.0
    %1480 = vmatpush1.xpose.msra.mxu0 0.0
    %1481 = vmatprep.subr.mxu0 0.0
    %1482 = vmatpush1.xpose.msra.mxu0 0.0
    %1483 = vmatprep.subr.mxu0 0.0
    %1484 = vmatpush1.xpose.msra.mxu0 0.0
    %1485 = vmatprep.subr.mxu0 0.0
    %1486 = vmatpush1.xpose.msra.mxu0 0.0
    %1487 = vmatprep.subr.mxu0 0.0
    %1488 = vmatpush1.xpose.msra.mxu0 0.0
    %1489 = vmatprep.subr.mxu0 0.0
    %1490 = vmatpush1.xpose.msra.mxu0 0.0
    %1491 = vmatprep.subr.mxu0 0.0
    %1492 = vmatpush1.xpose.msra.mxu0 0.0
    %1493 = vmatprep.subr.mxu0 0.0
    %1494 = vmatpush1.xpose.msra.mxu0 0.0
    %1495 = vmatprep.subr.mxu0 0.0
    %1496 = vmatpush1.xpose.msra.mxu0 0.0
    %1497 = vmatprep.subr.mxu0 0.0
    %1498 = vmatpush1.xpose.msra.mxu0 0.0
    %1499 = vmatprep.subr.mxu0 0.0
    %1500 = vmatpush1.xpose.msra.mxu0 0.0
    %1501 = vmatprep.subr.mxu0 0.0
    %1502 = vmatpush1.xpose.msra.mxu0 0.0
    %1503 = vmatprep.subr.mxu0 0.0
    %1504 = vmatpush1.xpose.msra.mxu0 0.0
    %1505 = vmatprep.subr.mxu0 0.0
    %1506 = vmatpush1.xpose.msra.mxu0 0.0
    %1507 = vmatprep.subr.mxu0 0.0
    %1508 = vmatpush1.xpose.msra.mxu0 0.0
    %1509 = vmatprep.subr.mxu0 0.0
    %1510 = vmatpush1.xpose.msra.mxu0 0.0
    %1511 = vmatprep.subr.mxu0 0.0
    %1512 = vmatpush1.xpose.msra.mxu0 0.0
    %1513 = vmatprep.subr.mxu0 0.0
    %1514 = vmatpush1.xpose.msra.mxu0 0.0
    %1515 = vmatprep.subr.mxu0 0.0
    %1516 = vmatpush1.xpose.msra.mxu0 0.0
    %1517 = vmatprep.subr.mxu0 0.0
    %1518 = vmatpush1.xpose.msra.mxu0 0.0
    %1519 = vmatprep.subr.mxu0 0.0
    %1520 = vmatpush1.xpose.msra.mxu0 0.0
    %1521 = vmatprep.subr.mxu0 0.0
    %1522 = vmatpush1.xpose.msra.mxu0 0.0
    %1523 = vmatprep.subr.mxu0 0.0
    %1524 = vmatpush1.xpose.msra.mxu0 0.0
    %1525 = vmatprep.subr.mxu0 0.0
    %1526 = vmatpush1.xpose.msra.mxu0 0.0
    %1527 = vmatprep.mubr.f32.mxu0 0.0
    %1528 = vmatmul.mubr.f32.gmra.mrb[0].mxu0 %v1449
    %v1529 = vpop.f32.mrb[0].mxu0
    %v1530 = vadd.f32 0.0, %v1529
    %v1531 = vpop.f32.mrb[0].mxu0
    %1532 = vmatprep.mubr.f32.mxu0 0.0
    %1533 = vmatmul.mubr.f32.gmra.mrb[0].mxu0 %v1449
    %v1534 = vpop.f32.mrb[0].mxu0
    %v1535 = vadd.f32 0.0, %v1534
    %v1536 = vpop.f32.mrb[0].mxu0
    %1537 = vmatprep.mubr.f32.mxu0 0.0
    %1538 = vmatmul.mubr.f32.gmra.mrb[0].mxu0 %v1449
    %v1539 = vpop.f32.mrb[0].mxu0
    %v1540 = vadd.f32 0.0, %v1539
    %v1541 = vpop.f32.mrb[0].mxu0
    %1542 = vmatprep.mubr.f32.mxu0 0.0
    %1543 = vmatmul.mubr.f32.gmra.mrb[0].mxu0 %v1449
    %v1544 = vpop.f32.mrb[0].mxu0
    %v1545 = vadd.f32 0.0, %v1544
    %v1546 = vpop.f32.mrb[0].mxu0
    %1547 = vdwg.mxu0
    %v1548 = vlaneseq
    %v1549 = vshrl.u32 %v1548, 7
    %v1550 = vadd.s32 %v1549, 8
    %v1551 = vadd.s32 %v1549, 16
    %v1552 = vadd.s32 %v1549, 24
    %v1553 = vlaneseq
    %v1554 = vand.u32 %v1553, 127
    %1555 = vset.pattern.permute.xlu0 0
    %1556 = vperm.xlu0 %1555, %v1440
    %v1557 = vpop.permute.xlu0 %1556
    %1559 = vset.pattern.permute.xlu0 0
    %1560 = vperm.xlu0 %1559, %v1441
    %v1561 = vpop.permute.xlu0 %1560
    %1563 = vset.pattern.permute.xlu0 0
    %1564 = vperm.xlu0 %1563, %v1442
    %v1565 = vpop.permute.xlu0 %1564
    %1567 = vset.pattern.permute.xlu0 0
    %1568 = vperm.xlu0 %1567, %v1443
    %v1569 = vpop.permute.xlu0 %1568
    %vm1571 = vcmp.gt.f32.partialorder %v1557, %v1530
    %vm1572 = vcmp.gt.f32.partialorder %v1561, %v1535
    %vm1573 = vcmp.gt.f32.partialorder %v1565, %v1540
    %vm1574 = vcmp.gt.f32.partialorder %v1569, %v1545
    %vm1575 = vcmp.eq.f32.partialorder %v1557, %v1530
    %vm1576 = vcmp.eq.f32.partialorder %v1561, %v1535
    %vm1577 = vcmp.eq.f32.partialorder %v1565, %v1540
    %vm1578 = vcmp.eq.f32.partialorder %v1569, %v1545
    %vm1579 = vcmp.lt.s32.totalorder %v1549, %v1554
    %vm1580 = vcmp.lt.s32.totalorder %v1550, %v1554
    %vm1581 = vcmp.lt.s32.totalorder %v1551, %v1554
    %vm1582 = vcmp.lt.s32.totalorder %v1552, %v1554
    %vm1583 = vmand %vm1575, %vm1579
    %vm1584 = vmand %vm1576, %vm1580
    %vm1585 = vmand %vm1577, %vm1581
    %vm1586 = vmand %vm1578, %vm1582
    %vm1587 = vmor %vm1571, %vm1583
    %vm1588 = vmor %vm1572, %vm1584
    %vm1589 = vmor %vm1573, %vm1585
    %vm1590 = vmor %vm1574, %vm1586
    %v1591 = vsel %vm1587, 1, 0
    %v1592 = vsel %vm1588, 1, 0
    %v1593 = vsel %vm1589, 1, 0
    %v1594 = vsel %vm1590, 1, 0
    %v1595 = vcvt.s32.f32 %v1591
    %v1596 = vcvt.s32.f32 %v1592
    %v1597 = vcvt.s32.f32 %v1593
    %v1598 = vcvt.s32.f32 %v1594
    %v1599 = vsel %vm97, %v1595, 0.0
    %v1600 = vsel %vm97, %v1596, 0.0
    %v1601 = vadd.f32 %v1599, %v1600
    %v1602 = vsel %vm97, %v1597, 0.0
    %v1603 = vadd.f32 %v1601, %v1602
    %v1604 = vsel %vm97, %v1598, 0.0
    %v1605 = vadd.f32 %v1603, %v1604
    %v1606 = vrot.slane %v1605, 4
    %v1607 = vadd.f32 %v1605, %v1606
    %v1608 = vrot.slane %v1607, 2
    %v1609 = vadd.f32 %v1607, %v1608
    %v1610 = vrot.slane %v1609, 1
    %v1611 = vadd.f32 %v1609, %v1610
    %v1612 = vcvt.f32.s32.to.zero.pseudo %v1611
    %vm1613 = vcmp.eq.s32.totalorder %v1612, %v1549
    %vm1614 = vcmp.eq.s32.totalorder %v1612, %v1550
    %v1615 = vsel %vm1613, 1, 0
    %v1616 = vsel %vm1614, 1, 0
    %v1617 = vcvt.s32.f32 %v1615
    %v1618 = vcvt.s32.f32 %v1616
    %v1619 = vmul.f32 %v56, %v1557
    %v1620 = vmul.f32 %v57, %v1561
    %v1621 = vmul.f32 %v58, %v1565
    %v1622 = vmul.f32 %v59, %v1569
    %v1624 = vsel %vm97, %v1617, 0
    %v1627 = vsel %vm97, %v1618, 0
    %1629 = vmatprep.subr.mxu0 0.0
    %1630 = vmatpush1.msra.mxu0 %v1619
    %1631 = vmatprep.subr.mxu0 0.0
    %1632 = vmatpush1.msra.mxu0 %v1620
    %1633 = vmatprep.subr.mxu0 0.0
    %1634 = vmatpush1.msra.mxu0 %v1621
    %1635 = vmatprep.subr.mxu0 0.0
    %1636 = vmatpush1.msra.mxu0 %v1622
    %1637 = vmatprep.subr.mxu0 0.0
    %1638 = vmatpush1.msra.mxu0 0.0
    %1639 = vmatprep.subr.mxu0 0.0
    %1640 = vmatpush1.msra.mxu0 0.0
    %1641 = vmatprep.subr.mxu0 0.0
    %1642 = vmatpush1.msra.mxu0 0.0
    %1643 = vmatprep.subr.mxu0 0.0
    %1644 = vmatpush1.msra.mxu0 0.0
    %1645 = vmatprep.subr.mxu0 0.0
    %1646 = vmatpush1.msra.mxu0 0.0
    %1647 = vmatprep.subr.mxu0 0.0
    %1648 = vmatpush1.msra.mxu0 0.0
    %1649 = vmatprep.subr.mxu0 0.0
    %1650 = vmatpush1.msra.mxu0 0.0
    %1651 = vmatprep.subr.mxu0 0.0
    %1652 = vmatpush1.msra.mxu0 0.0
    %1653 = vmatprep.subr.mxu0 0.0
    %1654 = vmatpush1.msra.mxu0 0.0
    %1655 = vmatprep.subr.mxu0 0.0
    %1656 = vmatpush1.msra.mxu0 0.0
    %1657 = vmatprep.subr.mxu0 0.0
    %1658 = vmatpush1.msra.mxu0 0.0
    %1659 = vmatprep.subr.mxu0 0.0
    %1660 = vmatpush1.msra.mxu0 0.0
    %1661 = vmatprep.subr.mxu0 0.0
    %1662 = vmatpush1.msra.mxu0 0.0
    %1663 = vmatprep.subr.mxu0 0.0
    %1664 = vmatpush1.msra.mxu0 0.0
    %1665 = vmatprep.subr.mxu0 0.0
    %1666 = vmatpush1.msra.mxu0 0.0
    %1667 = vmatprep.subr.mxu0 0.0
    %1668 = vmatpush1.msra.mxu0 0.0
    %1669 = vmatprep.subr.mxu0 0.0
    %1670 = vmatpush1.msra.mxu0 0.0
    %1671 = vmatprep.subr.mxu0 0.0
    %1672 = vmatpush1.msra.mxu0 0.0
    %1673 = vmatprep.subr.mxu0 0.0
    %1674 = vmatpush1.msra.mxu0 0.0
    %1675 = vmatprep.subr.mxu0 0.0
    %1676 = vmatpush1.msra.mxu0 0.0
    %1677 = vmatprep.subr.mxu0 0.0
    %1678 = vmatpush1.msra.mxu0 0.0
    %1679 = vmatprep.subr.mxu0 0.0
    %1680 = vmatpush1.msra.mxu0 0.0
    %1681 = vmatprep.subr.mxu0 0.0
    %1682 = vmatpush1.msra.mxu0 0.0
    %1683 = vmatprep.subr.mxu0 0.0
    %1684 = vmatpush1.msra.mxu0 0.0
    %1685 = vmatprep.subr.mxu0 0.0
    %1686 = vmatpush1.msra.mxu0 0.0
    %1687 = vmatprep.subr.mxu0 0.0
    %1688 = vmatpush1.msra.mxu0 0.0
    %1689 = vmatprep.subr.mxu0 0.0
    %1690 = vmatpush1.msra.mxu0 0.0
    %1691 = vmatprep.subr.mxu0 0.0
    %1692 = vmatpush1.msra.mxu0 0.0
    %1693 = vmatprep.mubr.f32.mxu0 0.0
    %1694 = vmatmul.mubr.f32.gmra.mrb[0].mxu0 %v1624
    %v1695 = vpop.f32.mrb[0].mxu0
    %v1696 = vadd.f32 0.0, %v1695
    %v1697 = vpop.f32.mrb[0].mxu0
    %1698 = vmatprep.mubr.f32.mxu0 0.0
    %1699 = vmatmul.mubr.f32.gmra.mrb[0].mxu0 %v1627
    %v1700 = vpop.f32.mrb[0].mxu0
    %v1701 = vadd.f32 0.0, %v1700
    %v1702 = vpop.f32.mrb[0].mxu0
    %1703 = vdwg.mxu0
    %1704 = vst.msk [vmem:[#allocation7] sm:$0xff] %vm97, %v1696
    %1705 = vst.msk [vmem:[#allocation7 + $0x8] sm:$0xff] %vm97, %v1701
    %v1706 = vcvt.s32.f32 %v1554
    %v1707 = vmul.f32 %v1617, %v1706
    %v1708 = vmul.f32 %v1618, %v1706
    %v1709 = vsel %vm97, %v1707, 0.0
    %1710 = vadd.xlane.f32.xlu0 %v1709
    %v1711 = vpop.xlane.xlu0 %1710
    %v1712 = vsel %vm97, %v1708, 0.0
    %1713 = vadd.xlane.f32.xlu0 %v1712
    %v1714 = vpop.xlane.xlu0 %1713
    %v1715 = vcvt.f32.s32.to.zero.pseudo %v1711
    %v1716 = vcvt.f32.s32.to.zero.pseudo %v1714
    %1717 = vst.msk [vmem:[%s9] sm:$0xff] %vm301, %v1715
    %1718 = vst.msk [vmem:[%s9 + $0x8] sm:$0xff] %vm301, %v1716
    // Predicated region
    $region38: #{het_sag_pooling.1} parent=1 // pred_check
      _
    $region39: #{het_sag_pooling.1} parent=1 // pred_check_branch
      %1720 = sbr.rel (0) target = $region41
    $region40: #{het_sag_pooling.1} parent=1 // pred_region
      %s1722 = ssub.s32 256, 256
      %1723 = vsyncadd [#allocation3], %s1722
      %s1724 = sshll.u32 [#allocation7], 4
      %s1725 = int_to_ptr.vmem [resolvable:$true] %s1724
      %1730 = dma.vmem_to_hbm [thread:$0]  %s1725, 256, %s7, [#allocation3], 128, 128, 8
    $region41: #{het_sag_pooling.1} parent=1 // pred_fallthru
      _
    // Predicated region
    $region42: #{het_sag_pooling.1} parent=1 // pred_check
      _
    $region43: #{het_sag_pooling.1} parent=1 // pred_check_branch
      %1732 = sbr.rel (0) target = $region45
    $region44: #{het_sag_pooling.1} parent=1 // pred_region
      _
    $region45: #{het_sag_pooling.1} parent=1 // pred_fallthru
      _
    // Predicated region
    $region46: #{het_sag_pooling.1} parent=1 // pred_check
      _
    $region47: #{het_sag_pooling.1} parent=1 // pred_check_branch
      %1734 = sbr.rel (0) target = $region49
    $region48: #{het_sag_pooling.1} parent=1 // pred_region
      _
    $region49: #{het_sag_pooling.1} parent=1 // pred_fallthru
      _
    // Predicated region
    $region50: #{het_sag_pooling.1} parent=1 // pred_check
      _
    $region51: #{het_sag_pooling.1} parent=1 // pred_check_branch
      %1736 = sbr.rel (0) target = $region53
    $region52: #{het_sag_pooling.1} parent=1 // pred_region
      %1737 = dma.done [#allocation3], 256
    $region53: #{het_sag_pooling.1} parent=1 // pred_fallthru
      _
    // Predicated region
    $region54: #{het_sag_pooling.1} parent=1 // pred_check
      _
    $region55: #{het_sag_pooling.1} parent=1 // pred_check_branch
      %1739 = sbr.rel (0) target = $region57
    $region56: #{het_sag_pooling.1} parent=1 // pred_region
      _
    $region57: #{het_sag_pooling.1} parent=1 // pred_fallthru
      _
    // Predicated region
    $region58: #{het_sag_pooling.1} parent=1 // pred_check
      _
    $region59: #{het_sag_pooling.1} parent=1 // pred_check_branch
      %1741 = sbr.rel (0) target = $region61
    $region60: #{het_sag_pooling.1} parent=1 // pred_region
      _
    $region61: #{het_sag_pooling.1} parent=1 // pred_fallthru
      _
    %1742 = vsyncpa [#allocation3], 1
    %1743 = vsyncpa [#allocation4], 1
    %1744 = vsyncpa [#allocation6], 1

</llo_original>
